<compile_context>
chip_gen: v7x
topology: tpu7x:2x2x1
jax: 0.10.0
libtpu: 0.0.40
codegen_flags: <defaults>
</compile_context>

<pallas_src>
import jax
import jax.numpy as jnp
from jax.experimental import pallas as pl
from jax.experimental.pallas import tpu as pltpu

PAD = 0  # Constants.PAD


def _round_up(x, m):
    return ((x + m - 1) // m) * m


def _decoder_kernel(gx_ref, enc_ref, mask_ref,
                    w_attn_h_ref, w_attn_e_ref, b_attn_ref, v_ref,
                    w_ic_ref, w_h_ref, b_hn_ref,
                    out_ref, h_ref, encp_ref):
    step = pl.program_id(0)
    Bp, Tp, Hp = enc_ref.shape

    # ---- one-time work (hidden-state init + encoder-side attention proj) ----
    @pl.when(step == 0)
    def _init():
        h_ref[...] = jnp.zeros_like(h_ref)
        enc_flat = enc_ref[...].reshape(Bp * Tp, Hp)            # bf16
        proj = jnp.dot(enc_flat, w_attn_e_ref[...],
                       preferred_element_type=jnp.float32)
        encp_ref[...] = (proj + b_attn_ref[...]).reshape(Bp, Tp, Hp)

    h = h_ref[...]                                              # (Bp, Hp) f32

    # ---- Attn('concat'): score_t = v . tanh(W_h h + W_e enc_t + b) ----------
    hid_proj = jnp.dot(h.astype(jnp.bfloat16), w_attn_h_ref[...],
                       preferred_element_type=jnp.float32)      # (Bp, Hp)
    hid_proj_b = hid_proj[:, None, :]                           # (Bp, 1, Hp)
    v_row = v_ref[...][None]                                    # (1, 1, Hp)

    # T-chunked energy/score computation: slice enc_proj from its scratch ref;
    # never hold the whole (Bp, Tp, Hp) energy tensor live at once.
    tc = Tp
    for cand in (32, 16, 8):
        if Tp % cand == 0:
            tc = cand
            break
    chunks = []
    for c in range(Tp // tc):
        enc_proj_c = encp_ref[:, c * tc:(c + 1) * tc, :]        # (Bp, tc, Hp)
        energy_c = jnp.tanh(hid_proj_b + enc_proj_c)
        chunks.append(jnp.sum(energy_c * v_row, axis=-1))       # (Bp, tc)
    scores = jnp.concatenate(chunks, axis=1) if len(chunks) > 1 else chunks[0]

    scores = jnp.where(mask_ref[...] > 0.5, -1e18, scores)      # masked_fill(PAD)
    scores = scores - jnp.max(scores, axis=1, keepdims=True)    # f32 logits
    e = jnp.exp(scores)
    denom = jnp.sum(e, axis=1, keepdims=True)
    attn = e * pl.reciprocal(denom, approx=True)                # softmax over T

    # context = attn_weights.bmm(encoder_outputs) -> (Bp, Hp), on the MXU.
    context = jnp.einsum('bqt,bth->bqh',
                         attn[:, None, :].astype(jnp.bfloat16), enc_ref[...],
                         preferred_element_type=jnp.float32)[:, 0, :]

    # ---- GRU cell; input-side x @ W_ix + b was precomputed (streamed in) ----
    gx = gx_ref[0]                                              # (Bp, 3Hp) f32
    gc = jnp.dot(context.astype(jnp.bfloat16), w_ic_ref[...],
                 preferred_element_type=jnp.float32)            # (Bp, 3Hp)
    gh = jnp.dot(h.astype(jnp.bfloat16), w_h_ref[...],
                 preferred_element_type=jnp.float32)            # (Bp, 3Hp)
    gi = gx + gc
    r = jax.nn.sigmoid(gi[:, :Hp] + gh[:, :Hp])
    z = jax.nn.sigmoid(gi[:, Hp:2 * Hp] + gh[:, Hp:2 * Hp])
    n = jnp.tanh(gi[:, 2 * Hp:] + r * (gh[:, 2 * Hp:] + b_hn_ref[...]))
    h_new = (1.0 - z) * n + z * h

    h_ref[...] = h_new
    out_ref[0] = h_new.astype(out_ref.dtype)


def _pack_params(params, H, Hp):
    """Fuse + zero-pad PyTorch-layout weights into lane-dense kernel operands."""
    f32, bf16 = jnp.float32, jnp.bfloat16
    w_ix = jnp.zeros((Hp, 3 * Hp), f32)
    w_ic = jnp.zeros((Hp, 3 * Hp), f32)
    w_h = jnp.zeros((Hp, 3 * Hp), f32)
    b_i = jnp.zeros((1, 3 * Hp), f32)
    for g in range(3):
        c0 = g * Hp
        w_ix = w_ix.at[:H, c0:c0 + H].set(params["w_ix"][g])
        w_ic = w_ic.at[:H, c0:c0 + H].set(params["w_ic"][g])
        w_h = w_h.at[:H, c0:c0 + H].set(params["w_hh"][g])
        b_i = b_i.at[0, c0:c0 + H].set(params["gru_b"][g])
    b_hn = jnp.zeros((1, Hp), f32).at[0, :H].set(params["gru_b"][3])
    w_attn_h = jnp.zeros((Hp, Hp), f32).at[:H, :H].set(params["w_attn_h"])
    w_attn_e = jnp.zeros((Hp, Hp), f32).at[:H, :H].set(params["w_attn_e"])
    b_attn = jnp.zeros((1, Hp), f32).at[0, :H].set(params["b_attn"][0])
    v = jnp.zeros((1, Hp), f32).at[0, :H].set(params["v"][0])
    return {
        "w_ix": w_ix, "b_i": b_i,                       # wrapper-side (hoisted matmul)
        "w_ic": w_ic.astype(bf16), "w_h": w_h.astype(bf16),   # MXU operands -> bf16
        "w_attn_h": w_attn_h.astype(bf16), "w_attn_e": w_attn_e.astype(bf16),
        "b_attn": b_attn, "v": v, "b_hn": b_hn,
    }


def bahdanau_attn_decoder_forward(params, tgt_seq, tgt_pos, tgt_sen_pos,
                                  src_sen_pos, enc_output):
    # tgt_pos / tgt_sen_pos are unused by the reference forward pass.
    del tgt_pos, tgt_sen_pos
    B, L = tgt_seq.shape
    T = enc_output.shape[1]
    H = params["emb"].shape[1]

    # Lane-dense padding targets (sublane=8, lane=128).
    Bp, Tp, Hp = _round_up(B, 8), _round_up(T, 8), _round_up(H, 128)

    p = _pack_params(params, H, Hp)

    # glue: embedding lookup + time-major transpose (plain JAX)
    emb = jnp.take(params["emb"], tgt_seq, axis=0)                    # (B, L, H)
    emb = jnp.transpose(emb, (1, 0, 2)).astype(jnp.float32)           # (L, B, H)
    # TODO(synk): nn.Dropout(p=0.1) omitted — eval-mode semantics (identity).
    emb_p = jnp.zeros((L, Bp, Hp), jnp.float32).at[:, :B, :H].set(emb)

    # Input-side GRU gates don't depend on the recurrence: one flat matmul for
    # all L steps, streamed into the kernel per grid step.
    gates_x = (emb_p.reshape(L * Bp, Hp) @ p["w_ix"] + p["b_i"]
               ).reshape(L, Bp, 3 * Hp)

    enc_p = jnp.zeros((Bp, Tp, Hp), jnp.bfloat16).at[:B, :T, :H].set(
        enc_output.astype(jnp.bfloat16))
    mask = (src_sen_pos == PAD).astype(jnp.float32)                   # (B, T)
    mask_p = jnp.ones((Bp, Tp), jnp.float32).at[:B, :T].set(mask)     # pad == PAD

    inv2 = lambda i: (0, 0)
    inv3 = lambda i: (0, 0, 0)

    # VMEM budget (double-buffered operands + scratch), clamped for v7x (64 MiB).
    est = (2 * Bp * 3 * Hp * 4                  # gates_x blocks (streamed)
           + 2 * Bp * Hp * 4                    # output blocks (streamed)
           + 2 * Bp * Tp * Hp * 2               # encoder outputs (bf16)
           + 2 * Bp * Tp * 4                    # PAD mask
           + 2 * (2 * Hp * Hp + 2 * Hp * 3 * Hp) * 2   # bf16 weights
           + 2 * 4 * Hp * 4                     # bias / v rows
           + Bp * Hp * 4                        # h scratch
           + Bp * Tp * Hp * 4)                  # enc_proj scratch
    vmem_limit = int(min(max(2 * est, 32 * 1024 * 1024), 64 * 1024 * 1024))

    out_p = pl.pallas_call(
        _decoder_kernel,
        out_shape=jax.ShapeDtypeStruct((L, Bp, Hp), jnp.float32),
        grid=(L,),
        in_specs=[
            pl.BlockSpec((1, Bp, 3 * Hp), lambda i: (i, 0, 0)),  # per-step x-gates
            pl.BlockSpec((Bp, Tp, Hp), inv3),      # encoder outputs (invariant)
            pl.BlockSpec((Bp, Tp), inv2),          # PAD mask (invariant)
            pl.BlockSpec((Hp, Hp), inv2),          # attn W (hidden half)
            pl.BlockSpec((Hp, Hp), inv2),          # attn W (encoder half)
            pl.BlockSpec((1, Hp), inv2),           # attn bias
            pl.BlockSpec((1, Hp), inv2),           # attn v
            pl.BlockSpec((Hp, 3 * Hp), inv2),      # GRU W_ic (context -> r,z,n)
            pl.BlockSpec((Hp, 3 * Hp), inv2),      # GRU W_h  (hidden  -> r,z,n)
            pl.BlockSpec((1, Hp), inv2),           # GRU b_hn
        ],
        out_specs=pl.BlockSpec((1, Bp, Hp), lambda i: (i, 0, 0)),
        scratch_shapes=[
            pltpu.VMEM((Bp, Hp), jnp.float32),        # recurrent hidden state
            pltpu.VMEM((Bp, Tp, Hp), jnp.float32),    # hoisted enc projection
        ],
        compiler_params=pltpu.CompilerParams(
            dimension_semantics=("arbitrary",),       # sequential recurrence over L
            vmem_limit_bytes=vmem_limit),
    )(gates_x, enc_p, mask_p, p["w_attn_h"], p["w_attn_e"], p["b_attn"], p["v"],
      p["w_ic"], p["w_h"], p["b_hn"])

    out = out_p[:, :B, :H]                         # drop padding
    return jnp.transpose(out, (1, 0, 2))           # (B, L, H) == output.transpose(0, 1)


def init_params(key, vocab_size, hidden_size):
    """Deterministic synthetic parameters (shapes implied by the module __init__)."""
    H = hidden_size
    k = 1.0 / jnp.sqrt(jnp.float32(H))
    keys = jax.random.split(key, 9)
    u = lambda kk, shape: jax.random.uniform(kk, shape, jnp.float32, -k, k)
    return {
        "emb": jax.random.normal(keys[0], (vocab_size, H), jnp.float32),
        "w_attn_h": u(keys[1], (H, H)),
        "w_attn_e": u(keys[2], (H, H)),
        "b_attn": u(keys[3], (1, H)),
        "v": jax.random.normal(keys[4], (1, H), jnp.float32) * k,
        "w_ix": u(keys[5], (3, H, H)),
        "w_ic": u(keys[6], (3, H, H)),
        "w_hh": u(keys[7], (3, H, H)),
        "gru_b": u(keys[8], (4, H)),
    }


def reference_forward(params, tgt_seq, src_sen_pos, enc_output):
    """Pure-JAX (f32) reference of the PyTorch forward, for validation."""
    B, L = tgt_seq.shape
    H = params["emb"].shape[1]
    emb = params["emb"][tgt_seq]             # (B, L, H)
    mask = src_sen_pos == PAD
    h = jnp.zeros((B, H), jnp.float32)
    b_attn, v = params["b_attn"][0], params["v"][0]
    outs = []
    for i in range(L):
        x = emb[:, i, :]
        energy = jnp.tanh((h @ params["w_attn_h"])[:, None, :]
                          + jnp.einsum("bth,hk->btk", enc_output, params["w_attn_e"])
                          + b_attn)
        scores = jnp.sum(energy * v, axis=-1)
        scores = jnp.where(mask, -1e18, scores)
        attn = jax.nn.softmax(scores, axis=1)
        ctx = jnp.einsum("bt,bth->bh", attn, enc_output)
        r = jax.nn.sigmoid(x @ params["w_ix"][0] + ctx @ params["w_ic"][0]
                           + h @ params["w_hh"][0] + params["gru_b"][0])
        z = jax.nn.sigmoid(x @ params["w_ix"][1] + ctx @ params["w_ic"][1]
                           + h @ params["w_hh"][1] + params["gru_b"][1])
        n = jnp.tanh(x @ params["w_ix"][2] + ctx @ params["w_ic"][2] + params["gru_b"][2]
                     + r * (h @ params["w_hh"][2] + params["gru_b"][3]))
        h = (1.0 - z) * n + z * h
        outs.append(h)
    return jnp.stack(outs, axis=1)           # (B, L, H)


if __name__ == "__main__":
    B, L, T, H, V = 2, 4, 8, 32, 20          # batch, tgt len, src len, hidden, vocab
    key = jax.random.PRNGKey(0)
    pkey, k1, k2 = jax.random.split(key, 3)

    params = init_params(pkey, V, H)
    tgt_seq = jax.random.randint(k1, (B, L), 1, V, dtype=jnp.int32)
    tgt_pos = jnp.tile(jnp.arange(L, dtype=jnp.int32)[None], (B, 1))   # unused by forward
    tgt_sen_pos = jnp.zeros((B, L), jnp.int32)                         # unused by forward
    src_sen_pos = jnp.array([[1, 2, 3, 4, 5, 0, 0, 0],
                             [1, 2, 3, 4, 5, 6, 7, 0]], jnp.int32)     # 0 == PAD
    enc_output = jax.random.normal(k2, (B, T, H), jnp.float32)

    out = bahdanau_attn_decoder_forward(params, tgt_seq, tgt_pos, tgt_sen_pos,
                                        src_sen_pos, enc_output)
    out = jax.block_until_ready(out)

    ref = reference_forward(params, tgt_seq, src_sen_pos, enc_output)
    assert out.shape == (B, L, H), out.shape
    max_err = float(jnp.max(jnp.abs(out - ref)))
    # bf16 MXU operands (f32 accumulate) + approx reciprocal -> loosened tolerance.
    assert max_err < 5e-2, f"mismatch vs reference: {max_err}"
    print("KERNEL_OK")
</pallas_src>

<mosaic_0001>
module attributes {stable_mosaic.version = 11 : i64} {
  func.func @_decoder_kernel(%arg0: i32, %arg1: memref<1x8x384xf32, #tpu.memory_space<vmem>>, %arg2: memref<8x8x128xbf16, #tpu.memory_space<vmem>>, %arg3: memref<8x8xf32, #tpu.memory_space<vmem>>, %arg4: memref<128x128xbf16, #tpu.memory_space<vmem>>, %arg5: memref<128x128xbf16, #tpu.memory_space<vmem>>, %arg6: memref<1x128xf32, #tpu.memory_space<vmem>>, %arg7: memref<1x128xf32, #tpu.memory_space<vmem>>, %arg8: memref<128x384xbf16, #tpu.memory_space<vmem>>, %arg9: memref<128x384xbf16, #tpu.memory_space<vmem>>, %arg10: memref<1x128xf32, #tpu.memory_space<vmem>>, %arg11: memref<1x8x128xf32, #tpu.memory_space<vmem>>, %arg12: memref<8x128xf32, #tpu.memory_space<vmem>>, %arg13: memref<8x8x128xf32, #tpu.memory_space<vmem>>) attributes {dimension_semantics = [#tpu.dimension_semantics<arbitrary>], iteration_bounds = array<i64: 4>, scalar_prefetch = 0 : i64, scratch_operands = 2 : i64, tpu.core_type = #tpu.core_type<tc>, window_params = [{transform_indices = @transform_0, window_bounds = array<i64: 1, 8, 384>}, {pipeline_mode = #tpu.pipeline_mode<synchronous>, transform_indices = @transform_1, window_bounds = array<i64: 8, 8, 128>}, {pipeline_mode = #tpu.pipeline_mode<synchronous>, transform_indices = @transform_2, window_bounds = array<i64: 8, 8>}, {pipeline_mode = #tpu.pipeline_mode<synchronous>, transform_indices = @transform_3, window_bounds = array<i64: 128, 128>}, {pipeline_mode = #tpu.pipeline_mode<synchronous>, transform_indices = @transform_4, window_bounds = array<i64: 128, 128>}, {pipeline_mode = #tpu.pipeline_mode<synchronous>, transform_indices = @transform_5, window_bounds = array<i64: 1, 128>}, {pipeline_mode = #tpu.pipeline_mode<synchronous>, transform_indices = @transform_6, window_bounds = array<i64: 1, 128>}, {pipeline_mode = #tpu.pipeline_mode<synchronous>, transform_indices = @transform_7, window_bounds = array<i64: 128, 384>}, {pipeline_mode = #tpu.pipeline_mode<synchronous>, transform_indices = @transform_8, window_bounds = array<i64: 128, 384>}, {pipeline_mode = #tpu.pipeline_mode<synchronous>, transform_indices = @transform_9, window_bounds = array<i64: 1, 128>}, {transform_indices = @transform_10, window_bounds = array<i64: 1, 8, 128>}]} {
    %c0_i32 = arith.constant 0 : i32
    %0 = arith.cmpi eq, %arg0, %c0_i32 : i32
    %1 = arith.extui %0 : i1 to i32
    %c0_i32_0 = arith.constant 0 : i32
    %2 = arith.cmpi ne, %1, %c0_i32_0 : i32
    scf.if %2 {
      %cst_39 = arith.constant 0.000000e+00 : f32
      %79 = vector.broadcast %cst_39 : f32 to vector<8x128xf32>
      %c0_40 = arith.constant 0 : index
      %c0_41 = arith.constant 0 : index
      %80 = vector.load %arg12[%c0_40, %c0_41] : memref<8x128xf32, #tpu.memory_space<vmem>>, vector<8x128xf32>
      tpu.vector_store %arg12[%c0_40, %c0_41], %79 {strides = array<i32>} : memref<8x128xf32, #tpu.memory_space<vmem>>, vector<8x128xf32>,
      %c0_42 = arith.constant 0 : index
      %c0_43 = arith.constant 0 : index
      %c0_44 = arith.constant 0 : index
      %81 = vector.load %arg2[%c0_42, %c0_43, %c0_44] : memref<8x8x128xbf16, #tpu.memory_space<vmem>>, vector<8x8x128xbf16>
      %82 = vector.shape_cast %81 : vector<8x8x128xbf16> to vector<64x128xbf16>
      %c0_45 = arith.constant 0 : index
      %c0_46 = arith.constant 0 : index
      %83 = vector.load %arg5[%c0_45, %c0_46] : memref<128x128xbf16, #tpu.memory_space<vmem>>, vector<128x128xbf16>
      %cst_47 = arith.constant dense<0.000000e+00> : vector<64x128xf32>
      %84 = tpu.matmul %82, %83, %cst_47 {dimension_numbers = #tpu.dot_dimension_numbers<[1], [0], [0], [1], [0, 0, 1, 1], [], []>} : vector<64x128xbf16>, vector<128x128xbf16>, vector<64x128xf32> -> vector<64x128xf32>
      %c0_48 = arith.constant 0 : index
      %c0_49 = arith.constant 0 : index
      %85 = vector.load %arg6[%c0_48, %c0_49] : memref<1x128xf32, #tpu.memory_space<vmem>>, vector<1x128xf32>
      %86 = vector.broadcast %85 : vector<1x128xf32> to vector<64x128xf32>
      %87 = arith.addf %84, %86 : vector<64x128xf32>
      %88 = vector.shape_cast %87 : vector<64x128xf32> to vector<8x8x128xf32>
      %c0_50 = arith.constant 0 : index
      %c0_51 = arith.constant 0 : index
      %c0_52 = arith.constant 0 : index
      %89 = vector.load %arg13[%c0_50, %c0_51, %c0_52] : memref<8x8x128xf32, #tpu.memory_space<vmem>>, vector<8x8x128xf32>
      tpu.vector_store %arg13[%c0_50, %c0_51, %c0_52], %88 {strides = array<i32>} : memref<8x8x128xf32, #tpu.memory_space<vmem>>, vector<8x8x128xf32>,
    } else {
    }
    %c0 = arith.constant 0 : index
    %c0_1 = arith.constant 0 : index
    %3 = vector.load %arg12[%c0, %c0_1] : memref<8x128xf32, #tpu.memory_space<vmem>>, vector<8x128xf32>
    %4 = arith.truncf %3 : vector<8x128xf32> to vector<8x128xbf16>
    %c0_2 = arith.constant 0 : index
    %c0_3 = arith.constant 0 : index
    %5 = vector.load %arg4[%c0_2, %c0_3] : memref<128x128xbf16, #tpu.memory_space<vmem>>, vector<128x128xbf16>
    %cst = arith.constant dense<0.000000e+00> : vector<8x128xf32>
    %6 = tpu.matmul %4, %5, %cst {dimension_numbers = #tpu.dot_dimension_numbers<[1], [0], [0], [1], [0, 0, 1, 1], [], []>} : vector<8x128xbf16>, vector<128x128xbf16>, vector<8x128xf32> -> vector<8x128xf32>
    %7 = vector.shape_cast %6 : vector<8x128xf32> to vector<8x1x128xf32>
    %c0_4 = arith.constant 0 : index
    %c0_5 = arith.constant 0 : index
    %8 = vector.load %arg7[%c0_4, %c0_5] : memref<1x128xf32, #tpu.memory_space<vmem>>, vector<1x128xf32>
    %9 = vector.shape_cast %8 : vector<1x128xf32> to vector<1x1x128xf32>
    %c0_6 = arith.constant 0 : index
    %c0_7 = arith.constant 0 : index
    %c0_8 = arith.constant 0 : index
    %10 = vector.load %arg13[%c0_6, %c0_7, %c0_8] : memref<8x8x128xf32, #tpu.memory_space<vmem>>, vector<8x8x128xf32>
    %11 = vector.broadcast %7 : vector<8x1x128xf32> to vector<8x8x128xf32>
    %12 = arith.addf %11, %10 : vector<8x8x128xf32>
    %13 = math.tanh %12 : vector<8x8x128xf32>
    %14 = vector.broadcast %9 : vector<1x1x128xf32> to vector<8x8x128xf32>
    %15 = arith.mulf %13, %14 : vector<8x8x128xf32>
    %cst_9 = arith.constant dense<0.000000e+00> : vector<8x8xf32>
    %16 = vector.multi_reduction <add>, %15, %cst_9 [2] : vector<8x8x128xf32> to vector<8x8xf32>
    %c0_10 = arith.constant 0 : index
    %c0_11 = arith.constant 0 : index
    %17 = vector.load %arg3[%c0_10, %c0_11] : memref<8x8xf32, #tpu.memory_space<vmem>>, vector<8x8xf32>
    %cst_12 = arith.constant 5.000000e-01 : f32
    %18 = vector.broadcast %cst_12 : f32 to vector<8x8xf32>
    %19 = arith.cmpf ogt, %17, %18 : vector<8x8xf32>
    %cst_13 = arith.constant -9.99999984E+17 : f32
    %20 = vector.broadcast %cst_13 : f32 to vector<8x8xf32>
    %21 = arith.select %19, %20, %16 : vector<8x8xi1>, vector<8x8xf32>
    %cst_14 = arith.constant dense<0xFF800000> : vector<8xf32>
    %22 = vector.multi_reduction <maximumf>, %21, %cst_14 [1] : vector<8x8xf32> to vector<8xf32>
    %23 = vector.shape_cast %22 : vector<8xf32> to vector<8x1xf32>
    %24 = vector.broadcast %23 : vector<8x1xf32> to vector<8x8xf32>
    %25 = arith.subf %21, %24 : vector<8x8xf32>
    %26 = math.exp %25 : vector<8x8xf32>
    %cst_15 = arith.constant dense<0.000000e+00> : vector<8xf32>
    %27 = vector.multi_reduction <add>, %26, %cst_15 [1] : vector<8x8xf32> to vector<8xf32>
    %28 = vector.shape_cast %27 : vector<8xf32> to vector<8x1xf32>
    %29 = tpu.reciprocal %28 {approx = true} : vector<8x1xf32> -> vector<8x1xf32>
    %30 = vector.broadcast %29 : vector<8x1xf32> to vector<8x8xf32>
    %31 = arith.mulf %26, %30 : vector<8x8xf32>
    %32 = vector.shape_cast %31 : vector<8x8xf32> to vector<8x1x8xf32>
    %33 = arith.truncf %32 : vector<8x1x8xf32> to vector<8x1x8xbf16>
    %c0_16 = arith.constant 0 : index
    %c0_17 = arith.constant 0 : index
    %c0_18 = arith.constant 0 : index
    %34 = vector.load %arg2[%c0_16, %c0_17, %c0_18] : memref<8x8x128xbf16, #tpu.memory_space<vmem>>, vector<8x8x128xbf16>
    "tpu.trace_start"() <{level = 10 : i32, message = "bqt,bth->bqh"}> : () -> ()
    %cst_19 = arith.constant dense<0.000000e+00> : vector<8x1x128xf32>
    %35 = tpu.matmul %33, %34, %cst_19 {dimension_numbers = #tpu.dot_dimension_numbers<[2], [1], [1], [2], [0, 0, 0, 1, 1, 2], [0], [0]>} : vector<8x1x8xbf16>, vector<8x8x128xbf16>, vector<8x1x128xf32> -> vector<8x1x128xf32>
    "tpu.trace_stop"() : () -> ()
    %36 = vector.shape_cast %35 : vector<8x1x128xf32> to vector<8x128xf32>
    %c0_20 = arith.constant 0 : index
    %c0_21 = arith.constant 0 : index
    %c0_22 = arith.constant 0 : index
    %37 = vector.load %arg1[%c0_20, %c0_21, %c0_22] : memref<1x8x384xf32, #tpu.memory_space<vmem>>, vector<1x8x384xf32>
    %38 = vector.shape_cast %37 : vector<1x8x384xf32> to vector<8x384xf32>
    %39 = arith.truncf %36 : vector<8x128xf32> to vector<8x128xbf16>
    %c0_23 = arith.constant 0 : index
    %c0_24 = arith.constant 0 : index
    %40 = vector.load %arg8[%c0_23, %c0_24] : memref<128x384xbf16, #tpu.memory_space<vmem>>, vector<128x384xbf16>
    %cst_25 = arith.constant dense<0.000000e+00> : vector<8x384xf32>
    %41 = tpu.matmul %39, %40, %cst_25 {dimension_numbers = #tpu.dot_dimension_numbers<[1], [0], [0], [1], [0, 0, 1, 1], [], []>} : vector<8x128xbf16>, vector<128x384xbf16>, vector<8x384xf32> -> vector<8x384xf32>
    %42 = arith.truncf %3 : vector<8x128xf32> to vector<8x128xbf16>
    %c0_26 = arith.constant 0 : index
    %c0_27 = arith.constant 0 : index
    %43 = vector.load %arg9[%c0_26, %c0_27] : memref<128x384xbf16, #tpu.memory_space<vmem>>, vector<128x384xbf16>
    %cst_28 = arith.constant dense<0.000000e+00> : vector<8x384xf32>
    %44 = tpu.matmul %42, %43, %cst_28 {dimension_numbers = #tpu.dot_dimension_numbers<[1], [0], [0], [1], [0, 0, 1, 1], [], []>} : vector<8x128xbf16>, vector<128x384xbf16>, vector<8x384xf32> -> vector<8x384xf32>
    %45 = arith.addf %38, %41 : vector<8x384xf32>
    %46 = vector.extract_strided_slice %45 {offsets = [0, 0], sizes = [8, 128], strides = [1, 1]} : vector<8x384xf32> to vector<8x128xf32>
    %47 = vector.extract_strided_slice %44 {offsets = [0, 0], sizes = [8, 128], strides = [1, 1]} : vector<8x384xf32> to vector<8x128xf32>
    %48 = arith.addf %46, %47 : vector<8x128xf32>
    %49 = arith.negf %48 : vector<8x128xf32>
    %50 = math.exp %49 : vector<8x128xf32>
    %cst_29 = arith.constant 1.000000e+00 : f32
    %51 = vector.broadcast %cst_29 : f32 to vector<8x128xf32>
    %52 = arith.addf %51, %50 : vector<8x128xf32>
    %53 = arith.divf %51, %52 : vector<8x128xf32>
    %54 = vector.extract_strided_slice %45 {offsets = [0, 128], sizes = [8, 128], strides = [1, 1]} : vector<8x384xf32> to vector<8x128xf32>
    %55 = vector.extract_strided_slice %44 {offsets = [0, 128], sizes = [8, 128], strides = [1, 1]} : vector<8x384xf32> to vector<8x128xf32>
    %56 = arith.addf %54, %55 : vector<8x128xf32>
    %57 = arith.negf %56 : vector<8x128xf32>
    %58 = math.exp %57 : vector<8x128xf32>
    %cst_30 = arith.constant 1.000000e+00 : f32
    %59 = vector.broadcast %cst_30 : f32 to vector<8x128xf32>
    %60 = arith.addf %59, %58 : vector<8x128xf32>
    %61 = arith.divf %59, %60 : vector<8x128xf32>
    %62 = vector.extract_strided_slice %45 {offsets = [0, 256], sizes = [8, 128], strides = [1, 1]} : vector<8x384xf32> to vector<8x128xf32>
    %63 = vector.extract_strided_slice %44 {offsets = [0, 256], sizes = [8, 128], strides = [1, 1]} : vector<8x384xf32> to vector<8x128xf32>
    %c0_31 = arith.constant 0 : index
    %c0_32 = arith.constant 0 : index
    %64 = vector.load %arg10[%c0_31, %c0_32] : memref<1x128xf32, #tpu.memory_space<vmem>>, vector<1x128xf32>
    %65 = vector.broadcast %64 : vector<1x128xf32> to vector<8x128xf32>
    %66 = arith.addf %63, %65 : vector<8x128xf32>
    %67 = arith.mulf %53, %66 : vector<8x128xf32>
    %68 = arith.addf %62, %67 : vector<8x128xf32>
    %69 = math.tanh %68 : vector<8x128xf32>
    %cst_33 = arith.constant 1.000000e+00 : f32
    %70 = vector.broadcast %cst_33 : f32 to vector<8x128xf32>
    %71 = arith.subf %70, %61 : vector<8x128xf32>
    %72 = arith.mulf %71, %69 : vector<8x128xf32>
    %73 = arith.mulf %61, %3 : vector<8x128xf32>
    %74 = arith.addf %72, %73 : vector<8x128xf32>
    %c0_34 = arith.constant 0 : index
    %c0_35 = arith.constant 0 : index
    %75 = vector.load %arg12[%c0_34, %c0_35] : memref<8x128xf32, #tpu.memory_space<vmem>>, vector<8x128xf32>
    tpu.vector_store %arg12[%c0_34, %c0_35], %74 {strides = array<i32>} : memref<8x128xf32, #tpu.memory_space<vmem>>, vector<8x128xf32>,
    %c0_36 = arith.constant 0 : index
    %c0_37 = arith.constant 0 : index
    %c0_38 = arith.constant 0 : index
    %76 = vector.load %arg11[%c0_36, %c0_37, %c0_38] : memref<1x8x128xf32, #tpu.memory_space<vmem>>, vector<1x8x128xf32>
    %77 = vector.shape_cast %76 : vector<1x8x128xf32> to vector<8x128xf32>
    %78 = vector.shape_cast %74 : vector<8x128xf32> to vector<1x8x128xf32>
    tpu.vector_store %arg11[%c0_36, %c0_37, %c0_38], %78 {strides = array<i32>} : memref<1x8x128xf32, #tpu.memory_space<vmem>>, vector<1x8x128xf32>,
    return
  }
  func.func @transform_0(%arg0: i32) -> (i32, i32, i32) {
    %c0_i32 = arith.constant 0 : i32
    %c0_i32_0 = arith.constant 0 : i32
    %c0_i32_1 = arith.constant 0 : i32
    return %arg0, %c0_i32, %c0_i32_0 : i32, i32, i32
  }
  func.func @transform_1(%arg0: i32) -> (i32, i32, i32) {
    %c0_i32 = arith.constant 0 : i32
    %c0_i32_0 = arith.constant 0 : i32
    %c0_i32_1 = arith.constant 0 : i32
    %c0_i32_2 = arith.constant 0 : i32
    return %c0_i32, %c0_i32_0, %c0_i32_1 : i32, i32, i32
  }
  func.func @transform_2(%arg0: i32) -> (i32, i32) {
    %c0_i32 = arith.constant 0 : i32
    %c0_i32_0 = arith.constant 0 : i32
    %c0_i32_1 = arith.constant 0 : i32
    return %c0_i32, %c0_i32_0 : i32, i32
  }
  func.func @transform_3(%arg0: i32) -> (i32, i32) {
    %c0_i32 = arith.constant 0 : i32
    %c0_i32_0 = arith.constant 0 : i32
    %c0_i32_1 = arith.constant 0 : i32
    return %c0_i32, %c0_i32_0 : i32, i32
  }
  func.func @transform_4(%arg0: i32) -> (i32, i32) {
    %c0_i32 = arith.constant 0 : i32
    %c0_i32_0 = arith.constant 0 : i32
    %c0_i32_1 = arith.constant 0 : i32
    return %c0_i32, %c0_i32_0 : i32, i32
  }
  func.func @transform_5(%arg0: i32) -> (i32, i32) {
    %c0_i32 = arith.constant 0 : i32
    %c0_i32_0 = arith.constant 0 : i32
    %c0_i32_1 = arith.constant 0 : i32
    return %c0_i32, %c0_i32_0 : i32, i32
  }
  func.func @transform_6(%arg0: i32) -> (i32, i32) {
    %c0_i32 = arith.constant 0 : i32
    %c0_i32_0 = arith.constant 0 : i32
    %c0_i32_1 = arith.constant 0 : i32
    return %c0_i32, %c0_i32_0 : i32, i32
  }
  func.func @transform_7(%arg0: i32) -> (i32, i32) {
    %c0_i32 = arith.constant 0 : i32
    %c0_i32_0 = arith.constant 0 : i32
    %c0_i32_1 = arith.constant 0 : i32
    return %c0_i32, %c0_i32_0 : i32, i32
  }
  func.func @transform_8(%arg0: i32) -> (i32, i32) {
    %c0_i32 = arith.constant 0 : i32
    %c0_i32_0 = arith.constant 0 : i32
    %c0_i32_1 = arith.constant 0 : i32
    return %c0_i32, %c0_i32_0 : i32, i32
  }
  func.func @transform_9(%arg0: i32) -> (i32, i32) {
    %c0_i32 = arith.constant 0 : i32
    %c0_i32_0 = arith.constant 0 : i32
    %c0_i32_1 = arith.constant 0 : i32
    return %c0_i32, %c0_i32_0 : i32, i32
  }
  func.func @transform_10(%arg0: i32) -> (i32, i32, i32) {
    %c0_i32 = arith.constant 0 : i32
    %c0_i32_0 = arith.constant 0 : i32
    %c0_i32_1 = arith.constant 0 : i32
    return %arg0, %c0_i32, %c0_i32_0 : i32, i32, i32
  }
}

</mosaic_0001>

<llo_original>
// kernel: tpu_custom_call.1
$region0: #{tpu_custom_call.1}
  #allocation0 [shape = 'u32[]', space=smem, size = 0x4, offset = 0x4, fixed_abs, tag = 'smem constant byte address 0x4 - core index']
  #allocation1 [shape = 'u32[144,128]{1,0:T(1,128)}', space=vmem, size = 0x12000, scoped, tag = 'internal scratch']
  #allocation2 [shape = 'f32[8,128]{1,0:T(8,128)}', space=vmem, size = 0x1000, scoped, tag = 'scratch operand']
  #allocation3 [shape = 'f32[8,8,128]{2,1,0:T(8,128)}', space=vmem, size = 0x8000, scoped, tag = 'scratch operand']
  %s0 = inlined_call_operand.hbm [shape: f32[4,8,384], index: 0, kind: input, shape index: {}]
  %s1 = inlined_call_operand.hbm [shape: bf16[8,8,128], index: 1, kind: input, shape index: {}]
  %s2 = inlined_call_operand.hbm [shape: f32[8,8], index: 2, kind: input, shape index: {}]
  %s3 = inlined_call_operand.hbm [shape: bf16[128,128], index: 3, kind: input, shape index: {}]
  %s4 = inlined_call_operand.hbm [shape: bf16[128,128], index: 4, kind: input, shape index: {}]
  %s5 = inlined_call_operand.vmem [shape: f32[1,128], index: 5, kind: input, shape index: {}]
  %s6 = inlined_call_operand.vmem [shape: f32[1,128], index: 6, kind: input, shape index: {}]
  %s7 = inlined_call_operand.hbm [shape: bf16[128,384], index: 7, kind: input, shape index: {}]
  %s8 = inlined_call_operand.hbm [shape: bf16[128,384], index: 8, kind: input, shape index: {}]
  %s9 = inlined_call_operand.vmem [shape: f32[1,128], index: 9, kind: input, shape index: {}]
  %s10 = inlined_call_operand.hbm [shape: f32[4,8,128], index: 10, kind: output, shape index: {}]
  %s11 = sld [smem:[#allocation0]]
  $region105: #{tpu_custom_call.1} parent=0
    _
  %s13 = ssub.s32 1, %s11
  %s14 = scalar_select 0, %s13, %s11
  $region1: #{tpu_custom_call.1} parent=0
    #allocation4 [shape = 'u8[24576]{0}', space=vmem, size = 0x6000, scoped, tag = 'input window, operand 0']
    #allocation5 [shape = 's32[2]{0}', space=sflag, size = 0x8, scoped, tag = 'scoped memory for tpu_custom_call.1']
    #allocation6 [shape = 's32[2]{0}', space=sflag, size = 0x8, scoped, tag = 'scoped memory for tpu_custom_call.1']
    #allocation7 [shape = 'u8[16384]{0}', space=vmem, size = 0x4000, scoped, tag = 'input window, operand 1, single buffered']
    #allocation8 [shape = 's32[1]{0}', space=sflag, size = 0x4, scoped, tag = 'scoped memory for tpu_custom_call.1']
    #allocation9 [shape = 'u8[4096]{0}', space=vmem, size = 0x1000, scoped, tag = 'input window, operand 2, single buffered']
    #allocation10 [shape = 'u8[32768]{0}', space=vmem, size = 0x8000, scoped, tag = 'input window, operand 3, single buffered']
    #allocation11 [shape = 's32[1]{0}', space=sflag, size = 0x4, scoped, tag = 'scoped memory for tpu_custom_call.1']
    #allocation12 [shape = 'u8[32768]{0}', space=vmem, size = 0x8000, scoped, tag = 'input window, operand 4, single buffered']
    #allocation13 [shape = 'u8[98304]{0}', space=vmem, size = 0x18000, scoped, tag = 'input window, operand 7, single buffered']
    #allocation14 [shape = 's32[1]{0}', space=sflag, size = 0x4, scoped, tag = 'scoped memory for tpu_custom_call.1']
    #allocation15 [shape = 'u8[98304]{0}', space=vmem, size = 0x18000, scoped, tag = 'input window, operand 8, single buffered']
    #allocation16 [shape = 'u8[8192]{0}', space=vmem, size = 0x2000, scoped, tag = 'output window, operand 0']
    %15 = vsyncpa [#allocation5], 0
    %s16 = scalar_lea.sflag [#allocation5], 1
    %17 = vsyncpa %s16, 0
    %18 = vsyncpa [#allocation8], 0
    %19 = vsyncpa [#allocation11], 0
    %20 = vsyncpa [#allocation14], 0
    %21 = vsyncpa [#allocation6], 0
    %s22 = scalar_lea.sflag [#allocation6], 1
    %23 = vsyncpa %s22, 0
    loop: start=0, step=1, limit=6
    $region2: #{tpu_custom_call.1} parent=1 // loop_pre_header
      _
    $region3: #{tpu_custom_call.1} parent=1 // loop_header
      %s25 = sphi 0, %s29
      %p26 = scmp.ge.s32.totalorder %s25, 6
      %s35 = sphi 0, %s37
      %s38 = sphi 0, %s35
      %s39 = sphi 0, %s38
      %s55 = sphi 0, %s39
      %s59 = sphi 0, %s59
      %s61 = sphi 0, %s59
      %s62 = sphi 0, %s61
      %s76 = sphi 0, %s62
      %s80 = sphi 0, %s80
      %s82 = sphi 0, %s80
      %s83 = sphi 0, %s82
      %s97 = sphi 0, %s83
      %s101 = sphi 0, %s101
      %s103 = sphi 0, %s101
      %s104 = sphi 0, %s103
      %s118 = sphi 0, %s104
      %s122 = sphi 0, %s122
      %s124 = sphi 0, %s122
      %s125 = sphi 0, %s124
      %s139 = sphi 0, %s125
      %s143 = sphi 0, %s143
      %s145 = sphi 0, %s143
      %s146 = sphi 0, %s145
      %s160 = sphi 0, %s146
      %s164 = sphi 0, %s164
      %s166 = sphi 0, %s164
      %s167 = sphi 0, %s166
      %s181 = sphi 0, %s167
      %s185 = sphi 0, %s185
      %s187 = sphi 0, %s185
      %s188 = sphi 0, %s187
      %s202 = sphi 0, %s188
      %s206 = sphi 0, %s206
      %s208 = sphi 0, %s206
      %s209 = sphi 0, %s208
      %s223 = sphi 0, %s209
      %s227 = sphi 0, %s227
      %s229 = sphi 0, %s227
      %s230 = sphi 0, %s229
      %s244 = sphi 0, %s230
      %s250 = sphi 0, %s252
      %s253 = sphi 0, %s250
      %s254 = sphi 0, %s253
      %s270 = sphi 0, %s254
    $region4: #{tpu_custom_call.1} parent=1 // loop_header_branch
      %28 = sbr.rel (%p26) target = $region8
    $region5: #{tpu_custom_call.1} parent=1 // loop_body
      %s30 = ssub.s32 %s25, 1
      %s31 = ssub.s32 %s25, 2
      %s32 = sadd.s32 %s25, 1
      %s33 = ssub.s32 %s25, %s32
      %p34 = scmp.eq.s32.totalorder %s33, 0
      %s36 = sadd.s32 %s35, 1
      %s37 = scalar_select %p34, %s35, %s36
      %p40 = pneg %p34
      %p41 = scmp.eq.s32.totalorder %s25, 3
      %p42 = por %p40, %p41
      %p43 = scmp.ne.s32.totalorder %s35, %s38
      %p44 = scmp.eq.s32.totalorder %s25, 0
      %p45 = por %p43, %p44
      %p46 = scmp.ne.s32.totalorder %s35, %s38
      %p47 = scmp.eq.s32.totalorder %s30, 3
      %p48 = por %p46, %p47
      %p49 = scmp.ne.s32.totalorder %s38, %s39
      %p50 = scmp.eq.s32.totalorder %s30, 0
      %p51 = por %p49, %p50
      %p52 = scmp.ne.s32.totalorder %s38, %s39
      %p53 = scmp.eq.s32.totalorder %s31, 3
      %p54 = por %p52, %p53
      %p56 = scmp.ne.s32.totalorder %s39, %s55
      %p57 = scmp.eq.s32.totalorder %s31, 0
      %p58 = por %p56, %p57
      %s60 = sadd.s32 %s59, 1
      %p63 = scmp.eq.s32.totalorder %s25, 3
      %p64 = scmp.ne.s32.totalorder %s59, %s61
      %p65 = scmp.eq.s32.totalorder %s25, 0
      %p66 = por %p64, %p65
      %p67 = scmp.ne.s32.totalorder %s59, %s61
      %p68 = scmp.eq.s32.totalorder %s30, 3
      %p69 = por %p67, %p68
      %p70 = scmp.ne.s32.totalorder %s61, %s62
      %p71 = scmp.eq.s32.totalorder %s30, 0
      %p72 = por %p70, %p71
      %p73 = scmp.ne.s32.totalorder %s61, %s62
      %p74 = scmp.eq.s32.totalorder %s31, 3
      %p75 = por %p73, %p74
      %p77 = scmp.ne.s32.totalorder %s62, %s76
      %p78 = scmp.eq.s32.totalorder %s31, 0
      %p79 = por %p77, %p78
      %s81 = sadd.s32 %s80, 1
      %p84 = scmp.eq.s32.totalorder %s25, 3
      %p85 = scmp.ne.s32.totalorder %s80, %s82
      %p86 = scmp.eq.s32.totalorder %s25, 0
      %p87 = por %p85, %p86
      %p88 = scmp.ne.s32.totalorder %s80, %s82
      %p89 = scmp.eq.s32.totalorder %s30, 3
      %p90 = por %p88, %p89
      %p91 = scmp.ne.s32.totalorder %s82, %s83
      %p92 = scmp.eq.s32.totalorder %s30, 0
      %p93 = por %p91, %p92
      %p94 = scmp.ne.s32.totalorder %s82, %s83
      %p95 = scmp.eq.s32.totalorder %s31, 3
      %p96 = por %p94, %p95
      %p98 = scmp.ne.s32.totalorder %s83, %s97
      %p99 = scmp.eq.s32.totalorder %s31, 0
      %p100 = por %p98, %p99
      %s102 = sadd.s32 %s101, 1
      %p105 = scmp.eq.s32.totalorder %s25, 3
      %p106 = scmp.ne.s32.totalorder %s101, %s103
      %p107 = scmp.eq.s32.totalorder %s25, 0
      %p108 = por %p106, %p107
      %p109 = scmp.ne.s32.totalorder %s101, %s103
      %p110 = scmp.eq.s32.totalorder %s30, 3
      %p111 = por %p109, %p110
      %p112 = scmp.ne.s32.totalorder %s103, %s104
      %p113 = scmp.eq.s32.totalorder %s30, 0
      %p114 = por %p112, %p113
      %p115 = scmp.ne.s32.totalorder %s103, %s104
      %p116 = scmp.eq.s32.totalorder %s31, 3
      %p117 = por %p115, %p116
      %p119 = scmp.ne.s32.totalorder %s104, %s118
      %p120 = scmp.eq.s32.totalorder %s31, 0
      %p121 = por %p119, %p120
      %s123 = sadd.s32 %s122, 1
      %p126 = scmp.eq.s32.totalorder %s25, 3
      %p127 = scmp.ne.s32.totalorder %s122, %s124
      %p128 = scmp.eq.s32.totalorder %s25, 0
      %p129 = por %p127, %p128
      %p130 = scmp.ne.s32.totalorder %s122, %s124
      %p131 = scmp.eq.s32.totalorder %s30, 3
      %p132 = por %p130, %p131
      %p133 = scmp.ne.s32.totalorder %s124, %s125
      %p134 = scmp.eq.s32.totalorder %s30, 0
      %p135 = por %p133, %p134
      %p136 = scmp.ne.s32.totalorder %s124, %s125
      %p137 = scmp.eq.s32.totalorder %s31, 3
      %p138 = por %p136, %p137
      %p140 = scmp.ne.s32.totalorder %s125, %s139
      %p141 = scmp.eq.s32.totalorder %s31, 0
      %p142 = por %p140, %p141
      %s144 = sadd.s32 %s143, 1
      %p147 = scmp.eq.s32.totalorder %s25, 3
      %p148 = scmp.ne.s32.totalorder %s143, %s145
      %p149 = scmp.eq.s32.totalorder %s25, 0
      %p150 = por %p148, %p149
      %p151 = scmp.ne.s32.totalorder %s143, %s145
      %p152 = scmp.eq.s32.totalorder %s30, 3
      %p153 = por %p151, %p152
      %p154 = scmp.ne.s32.totalorder %s145, %s146
      %p155 = scmp.eq.s32.totalorder %s30, 0
      %p156 = por %p154, %p155
      %p157 = scmp.ne.s32.totalorder %s145, %s146
      %p158 = scmp.eq.s32.totalorder %s31, 3
      %p159 = por %p157, %p158
      %p161 = scmp.ne.s32.totalorder %s146, %s160
      %p162 = scmp.eq.s32.totalorder %s31, 0
      %p163 = por %p161, %p162
      %s165 = sadd.s32 %s164, 1
      %p168 = scmp.eq.s32.totalorder %s25, 3
      %p169 = scmp.ne.s32.totalorder %s164, %s166
      %p170 = scmp.eq.s32.totalorder %s25, 0
      %p171 = por %p169, %p170
      %p172 = scmp.ne.s32.totalorder %s164, %s166
      %p173 = scmp.eq.s32.totalorder %s30, 3
      %p174 = por %p172, %p173
      %p175 = scmp.ne.s32.totalorder %s166, %s167
      %p176 = scmp.eq.s32.totalorder %s30, 0
      %p177 = por %p175, %p176
      %p178 = scmp.ne.s32.totalorder %s166, %s167
      %p179 = scmp.eq.s32.totalorder %s31, 3
      %p180 = por %p178, %p179
      %p182 = scmp.ne.s32.totalorder %s167, %s181
      %p183 = scmp.eq.s32.totalorder %s31, 0
      %p184 = por %p182, %p183
      %s186 = sadd.s32 %s185, 1
      %p189 = scmp.eq.s32.totalorder %s25, 3
      %p190 = scmp.ne.s32.totalorder %s185, %s187
      %p191 = scmp.eq.s32.totalorder %s25, 0
      %p192 = por %p190, %p191
      %p193 = scmp.ne.s32.totalorder %s185, %s187
      %p194 = scmp.eq.s32.totalorder %s30, 3
      %p195 = por %p193, %p194
      %p196 = scmp.ne.s32.totalorder %s187, %s188
      %p197 = scmp.eq.s32.totalorder %s30, 0
      %p198 = por %p196, %p197
      %p199 = scmp.ne.s32.totalorder %s187, %s188
      %p200 = scmp.eq.s32.totalorder %s31, 3
      %p201 = por %p199, %p200
      %p203 = scmp.ne.s32.totalorder %s188, %s202
      %p204 = scmp.eq.s32.totalorder %s31, 0
      %p205 = por %p203, %p204
      %s207 = sadd.s32 %s206, 1
      %p210 = scmp.eq.s32.totalorder %s25, 3
      %p211 = scmp.ne.s32.totalorder %s206, %s208
      %p212 = scmp.eq.s32.totalorder %s25, 0
      %p213 = por %p211, %p212
      %p214 = scmp.ne.s32.totalorder %s206, %s208
      %p215 = scmp.eq.s32.totalorder %s30, 3
      %p216 = por %p214, %p215
      %p217 = scmp.ne.s32.totalorder %s208, %s209
      %p218 = scmp.eq.s32.totalorder %s30, 0
      %p219 = por %p217, %p218
      %p220 = scmp.ne.s32.totalorder %s208, %s209
      %p221 = scmp.eq.s32.totalorder %s31, 3
      %p222 = por %p220, %p221
      %p224 = scmp.ne.s32.totalorder %s209, %s223
      %p225 = scmp.eq.s32.totalorder %s31, 0
      %p226 = por %p224, %p225
      %s228 = sadd.s32 %s227, 1
      %p231 = scmp.eq.s32.totalorder %s25, 3
      %p232 = scmp.ne.s32.totalorder %s227, %s229
      %p233 = scmp.eq.s32.totalorder %s25, 0
      %p234 = por %p232, %p233
      %p235 = scmp.ne.s32.totalorder %s227, %s229
      %p236 = scmp.eq.s32.totalorder %s30, 3
      %p237 = por %p235, %p236
      %p238 = scmp.ne.s32.totalorder %s229, %s230
      %p239 = scmp.eq.s32.totalorder %s30, 0
      %p240 = por %p238, %p239
      %p241 = scmp.ne.s32.totalorder %s229, %s230
      %p242 = scmp.eq.s32.totalorder %s31, 3
      %p243 = por %p241, %p242
      %p245 = scmp.ne.s32.totalorder %s230, %s244
      %p246 = scmp.eq.s32.totalorder %s31, 0
      %p247 = por %p245, %p246
      %s248 = ssub.s32 %s25, %s32
      %p249 = scmp.eq.s32.totalorder %s248, 0
      %s251 = sadd.s32 %s250, 1
      %s252 = scalar_select %p249, %s250, %s251
      %p255 = pneg %p249
      %p256 = scmp.eq.s32.totalorder %s25, 3
      %p257 = por %p255, %p256
      %p258 = scmp.ne.s32.totalorder %s250, %s253
      %p259 = scmp.eq.s32.totalorder %s25, 0
      %p260 = por %p258, %p259
      %p261 = scmp.ne.s32.totalorder %s250, %s253
      %p262 = scmp.eq.s32.totalorder %s30, 3
      %p263 = por %p261, %p262
      %p264 = scmp.ne.s32.totalorder %s253, %s254
      %p265 = scmp.eq.s32.totalorder %s30, 0
      %p266 = por %p264, %p265
      %p267 = scmp.ne.s32.totalorder %s253, %s254
      %p268 = scmp.eq.s32.totalorder %s31, 3
      %p269 = por %p267, %p268
      %p271 = scmp.ne.s32.totalorder %s254, %s270
      %p272 = scmp.eq.s32.totalorder %s31, 0
      %p273 = por %p271, %p272
      %p274 = scmp.le.s32.totalorder 1, %s25
      %p275 = scmp.lt.s32.totalorder %s25, 5
      %p276 = pnand %p274, %p275
      %p277 = pneg %p276
      // Predicated region
      $region9: #{tpu_custom_call.1} parent=5 // pred_check
        _
      $region10: #{tpu_custom_call.1} parent=5 // pred_check_branch
        %279 = sbr.rel (%p276) target = $region12
      $region11: #{tpu_custom_call.1} parent=5 // pred_region
        %s280 = ssub.s32 %s25, 1
        // Predicated region
        $region13: #{tpu_custom_call.1} parent=11 // pred_check
          %p281 = pneg %p72
        $region14: #{tpu_custom_call.1} parent=11 // pred_check_branch
          %283 = sbr.rel (%p281) target = $region16
        $region15: #{tpu_custom_call.1} parent=11 // pred_region
          %s285 = ssub.s32 512, 512
          %286 = vsyncadd [#allocation8], %s285
          %s287 = sshll.u32 [#allocation7], 4
          %s288 = int_to_ptr.vmem [resolvable:$true] %s287
          %293 = dma.hbm_to_vmem [thread:$0]  %s1, 512, %s288, [#allocation8], 64, 64, 4
        $region16: #{tpu_custom_call.1} parent=11 // pred_fallthru
          _
        // Predicated region
        $region17: #{tpu_custom_call.1} parent=11 // pred_check
          %p294 = pneg %p93
        $region18: #{tpu_custom_call.1} parent=11 // pred_check_branch
          %296 = sbr.rel (%p294) target = $region20
        $region19: #{tpu_custom_call.1} parent=11 // pred_region
          %s298 = ssub.s32 128, 128
          %299 = vsyncadd [#allocation8], %s298
          %s301 = sshll.u32 [#allocation9], 4
          %s302 = int_to_ptr.vmem [resolvable:$true] %s301
          %304 = dma.hbm_to_vmem [thread:$0]  %s2, 128, %s302, [#allocation8]
        $region20: #{tpu_custom_call.1} parent=11 // pred_fallthru
          _
        // Predicated region
        $region21: #{tpu_custom_call.1} parent=11 // pred_check
          %p305 = pneg %p114
        $region22: #{tpu_custom_call.1} parent=11 // pred_check_branch
          %307 = sbr.rel (%p305) target = $region24
        $region23: #{tpu_custom_call.1} parent=11 // pred_region
          %s309 = ssub.s32 1024, 1024
          %310 = vsyncadd [#allocation11], %s309
          %s311 = sshll.u32 [#allocation10], 4
          %s312 = int_to_ptr.vmem [resolvable:$true] %s311
          %317 = dma.hbm_to_vmem [thread:$0]  %s3, 1024, %s312, [#allocation11], 64, 64, 4
        $region24: #{tpu_custom_call.1} parent=11 // pred_fallthru
          _
        // Predicated region
        $region25: #{tpu_custom_call.1} parent=11 // pred_check
          %p318 = pneg %p135
        $region26: #{tpu_custom_call.1} parent=11 // pred_check_branch
          %320 = sbr.rel (%p318) target = $region28
        $region27: #{tpu_custom_call.1} parent=11 // pred_region
          %s322 = ssub.s32 1024, 1024
          %323 = vsyncadd [#allocation11], %s322
          %s324 = sshll.u32 [#allocation12], 4
          %s325 = int_to_ptr.vmem [resolvable:$true] %s324
          %330 = dma.hbm_to_vmem [thread:$0]  %s4, 1024, %s325, [#allocation11], 64, 64, 4
        $region28: #{tpu_custom_call.1} parent=11 // pred_fallthru
          _
        // Predicated region
        $region29: #{tpu_custom_call.1} parent=11 // pred_check
          %p331 = pneg %p156
        $region30: #{tpu_custom_call.1} parent=11 // pred_check_branch
          %333 = sbr.rel (%p331) target = $region32
        $region31: #{tpu_custom_call.1} parent=11 // pred_region
          _
        $region32: #{tpu_custom_call.1} parent=11 // pred_fallthru
          _
        // Predicated region
        $region33: #{tpu_custom_call.1} parent=11 // pred_check
          %p334 = pneg %p177
        $region34: #{tpu_custom_call.1} parent=11 // pred_check_branch
          %336 = sbr.rel (%p334) target = $region36
        $region35: #{tpu_custom_call.1} parent=11 // pred_region
          _
        $region36: #{tpu_custom_call.1} parent=11 // pred_fallthru
          _
        // Predicated region
        $region37: #{tpu_custom_call.1} parent=11 // pred_check
          %p337 = pneg %p198
        $region38: #{tpu_custom_call.1} parent=11 // pred_check_branch
          %339 = sbr.rel (%p337) target = $region40
        $region39: #{tpu_custom_call.1} parent=11 // pred_region
          %s341 = ssub.s32 3072, 3072
          %342 = vsyncadd [#allocation14], %s341
          %s343 = sshll.u32 [#allocation13], 4
          %s344 = int_to_ptr.vmem [resolvable:$true] %s343
          %349 = dma.hbm_to_vmem [thread:$0]  %s7, 3072, %s344, [#allocation14], 192, 192, 12
        $region40: #{tpu_custom_call.1} parent=11 // pred_fallthru
          _
        // Predicated region
        $region41: #{tpu_custom_call.1} parent=11 // pred_check
          %p350 = pneg %p219
        $region42: #{tpu_custom_call.1} parent=11 // pred_check_branch
          %352 = sbr.rel (%p350) target = $region44
        $region43: #{tpu_custom_call.1} parent=11 // pred_region
          %s354 = ssub.s32 3072, 3072
          %355 = vsyncadd [#allocation14], %s354
          %s356 = sshll.u32 [#allocation15], 4
          %s357 = int_to_ptr.vmem [resolvable:$true] %s356
          %362 = dma.hbm_to_vmem [thread:$0]  %s8, 3072, %s357, [#allocation14], 192, 192, 12
        $region44: #{tpu_custom_call.1} parent=11 // pred_fallthru
          _
        // Predicated region
        $region45: #{tpu_custom_call.1} parent=11 // pred_check
          %p363 = pneg %p240
        $region46: #{tpu_custom_call.1} parent=11 // pred_check_branch
          %365 = sbr.rel (%p363) target = $region48
        $region47: #{tpu_custom_call.1} parent=11 // pred_region
          _
        $region48: #{tpu_custom_call.1} parent=11 // pred_fallthru
          _
      $region12: #{tpu_custom_call.1} parent=5 // pred_fallthru
        _
      %p366 = scmp.lt.s32.totalorder %s25, 4
      // Predicated region
      $region49: #{tpu_custom_call.1} parent=5 // pred_check
        %p367 = pneg %p366
      $region50: #{tpu_custom_call.1} parent=5 // pred_check_branch
        %369 = sbr.rel (%p367) target = $region52
      $region51: #{tpu_custom_call.1} parent=5 // pred_region
        // Predicated region
        $region53: #{tpu_custom_call.1} parent=51 // pred_check
          %p370 = pneg %p45
        $region54: #{tpu_custom_call.1} parent=51 // pred_check_branch
          %372 = sbr.rel (%p370) target = $region56
        $region55: #{tpu_custom_call.1} parent=51 // pred_region
          %s373 = sand.u32 %s35, 1
          %s374 = scalar_lea.sflag [#allocation5], %s373
          %s375 = sand.u32 %s35, 1
          %s376 = smul.addr %s375, 24
          %s377 = scalar_lea.vmem [#allocation4], %s376
          %s379 = ssub.s32 384, 384
          %380 = vsyncadd %s374, %s379
          %s381 = smul.addr %s25, 3
          %s382 = smul.addr %s381, 128
          %s383 = scalar_lea.hbm %s0, %s382
          %s385 = sshll.u32 %s377, 4
          %s386 = int_to_ptr.vmem [resolvable:$true] %s385
          %388 = dma.hbm_to_vmem [thread:$0]  %s383, 384, %s386, %s374
        $region56: #{tpu_custom_call.1} parent=51 // pred_fallthru
          _
      $region52: #{tpu_custom_call.1} parent=5 // pred_fallthru
        _
      %p389 = scmp.le.s32.totalorder 1, %s25
      %p390 = scmp.lt.s32.totalorder %s25, 5
      %p391 = pnand %p389, %p390
      %p392 = pneg %p391
      // Predicated region
      $region57: #{tpu_custom_call.1} parent=5 // pred_check
        _
      $region58: #{tpu_custom_call.1} parent=5 // pred_check_branch
        %394 = sbr.rel (%p391) target = $region60
      $region59: #{tpu_custom_call.1} parent=5 // pred_region
        %s395 = ssub.s32 %s25, 1
        %s396 = sand.u32 %s38, 1
        %s397 = scalar_lea.sflag [#allocation5], %s396
        %s398 = sand.u32 %s38, 1
        %s399 = smul.addr %s398, 24
        %s400 = scalar_lea.vmem [#allocation4], %s399
        // Predicated region
        $region61: #{tpu_custom_call.1} parent=59 // pred_check
          %p401 = pneg %p51
        $region62: #{tpu_custom_call.1} parent=59 // pred_check_branch
          %403 = sbr.rel (%p401) target = $region64
        $region63: #{tpu_custom_call.1} parent=59 // pred_region
          %404 = dma.done %s397, 384
        $region64: #{tpu_custom_call.1} parent=59 // pred_fallthru
          _
        // Predicated region
        $region65: #{tpu_custom_call.1} parent=59 // pred_check
          %p405 = pneg %p72
        $region66: #{tpu_custom_call.1} parent=59 // pred_check_branch
          %407 = sbr.rel (%p405) target = $region68
        $region67: #{tpu_custom_call.1} parent=59 // pred_region
          %408 = dma.done [#allocation8], 512
        $region68: #{tpu_custom_call.1} parent=59 // pred_fallthru
          _
        // Predicated region
        $region69: #{tpu_custom_call.1} parent=59 // pred_check
          %p409 = pneg %p93
        $region70: #{tpu_custom_call.1} parent=59 // pred_check_branch
          %411 = sbr.rel (%p409) target = $region72
        $region71: #{tpu_custom_call.1} parent=59 // pred_region
          %412 = dma.done [#allocation8], 128
        $region72: #{tpu_custom_call.1} parent=59 // pred_fallthru
          _
        // Predicated region
        $region73: #{tpu_custom_call.1} parent=59 // pred_check
          %p413 = pneg %p114
        $region74: #{tpu_custom_call.1} parent=59 // pred_check_branch
          %415 = sbr.rel (%p413) target = $region76
        $region75: #{tpu_custom_call.1} parent=59 // pred_region
          %416 = dma.done [#allocation11], 1024
        $region76: #{tpu_custom_call.1} parent=59 // pred_fallthru
          _
        // Predicated region
        $region77: #{tpu_custom_call.1} parent=59 // pred_check
          %p417 = pneg %p135
        $region78: #{tpu_custom_call.1} parent=59 // pred_check_branch
          %419 = sbr.rel (%p417) target = $region80
        $region79: #{tpu_custom_call.1} parent=59 // pred_region
          %420 = dma.done [#allocation11], 1024
        $region80: #{tpu_custom_call.1} parent=59 // pred_fallthru
          _
        // Predicated region
        $region81: #{tpu_custom_call.1} parent=59 // pred_check
          %p421 = pneg %p198
        $region82: #{tpu_custom_call.1} parent=59 // pred_check_branch
          %423 = sbr.rel (%p421) target = $region84
        $region83: #{tpu_custom_call.1} parent=59 // pred_region
          %424 = dma.done [#allocation14], 3072
        $region84: #{tpu_custom_call.1} parent=59 // pred_fallthru
          _
        // Predicated region
        $region85: #{tpu_custom_call.1} parent=59 // pred_check
          %p425 = pneg %p219
        $region86: #{tpu_custom_call.1} parent=59 // pred_check_branch
          %427 = sbr.rel (%p425) target = $region88
        $region87: #{tpu_custom_call.1} parent=59 // pred_region
          %428 = dma.done [#allocation14], 3072
        $region88: #{tpu_custom_call.1} parent=59 // pred_fallthru
          _
        %s429 = sand.u32 %s38, 1
        %s430 = scalar_lea.sflag [#allocation5], %s429
        %s431 = sand.u32 %s38, 1
        %s432 = smul.addr %s431, 24
        %s433 = scalar_lea.vmem [#allocation4], %s432
        %p434 = pneg %p51
        %p435 = pneg %p48
        %p436 = pneg %p72
        %p437 = pneg %p69
        %p438 = pneg %p93
        %p439 = pneg %p90
        %p440 = pneg %p114
        %p441 = pneg %p111
        %p442 = pneg %p135
        %p443 = pneg %p132
        %p444 = pneg %p156
        %p445 = pneg %p153
        %p446 = pneg %p177
        %p447 = pneg %p174
        %p448 = pneg %p198
        %p449 = pneg %p195
        %p450 = pneg %p219
        %p451 = pneg %p216
        %p452 = pneg %p240
        %p453 = pneg %p237
        %p454 = pneg %p266
        %p455 = pneg %p263
        %s456 = sand.u32 %s253, 1
        %s457 = scalar_lea.sflag [#allocation6], %s456
        %s458 = sand.u32 %s253, 1
        %s459 = smul.addr %s458, 8
        %s460 = scalar_lea.vmem [#allocation16], %s459
        %p462 = scmp.eq.s32.totalorder %s30, 0
        // Predicated region
        $region89: #{tpu_custom_call.1} parent=59 // pred_check
          %p463 = pneg %p462
        $region90: #{tpu_custom_call.1} parent=59 // pred_check_branch
          %465 = sbr.rel (%p463) target = $region92
        $region91: #{tpu_custom_call.1} parent=59 // pred_region
          %466 = vst [vmem:[#allocation2] sm:$0xff] 0.0
          %v467 = vld [vmem:[#allocation7] sm:$0xf]
          %v468 = vld [vmem:[#allocation7 + $0x4] sm:$0xf]
          %v469 = vld [vmem:[#allocation7 + $0x8] sm:$0xf]
          %v470 = vld [vmem:[#allocation7 + $0xc] sm:$0xf]
          %v471 = vld [vmem:[#allocation7 + $0x10] sm:$0xf]
          %v472 = vld [vmem:[#allocation7 + $0x14] sm:$0xf]
          %v473 = vld [vmem:[#allocation7 + $0x18] sm:$0xf]
          %v474 = vld [vmem:[#allocation7 + $0x1c] sm:$0xf]
          %v475 = vld [vmem:[#allocation12] sm:$0xf]
          %v476 = vld [vmem:[#allocation12 + $0x4] sm:$0xf]
          %v477 = vld [vmem:[#allocation12 + $0x8] sm:$0xf]
          %v478 = vld [vmem:[#allocation12 + $0xc] sm:$0xf]
          %v479 = vld [vmem:[#allocation12 + $0x10] sm:$0xf]
          %v480 = vld [vmem:[#allocation12 + $0x14] sm:$0xf]
          %v481 = vld [vmem:[#allocation12 + $0x18] sm:$0xf]
          %v482 = vld [vmem:[#allocation12 + $0x1c] sm:$0xf]
          %v483 = vld [vmem:[#allocation12 + $0x20] sm:$0xf]
          %v484 = vld [vmem:[#allocation12 + $0x24] sm:$0xf]
          %v485 = vld [vmem:[#allocation12 + $0x28] sm:$0xf]
          %v486 = vld [vmem:[#allocation12 + $0x2c] sm:$0xf]
          %v487 = vld [vmem:[#allocation12 + $0x30] sm:$0xf]
          %v488 = vld [vmem:[#allocation12 + $0x34] sm:$0xf]
          %v489 = vld [vmem:[#allocation12 + $0x38] sm:$0xf]
          %v490 = vld [vmem:[#allocation12 + $0x3c] sm:$0xf]
          %v491 = vld [vmem:[%s5] sm:$0x1]
          %v493 = vlaneseq
          %v494 = vshrl.u32 %v493, 7
          %v495 = vsub.s32 0, %v494
          %v496 = vrot.slane %v491, %v495
          %v506 = vunpack.c.l.b16 %v467
          %v507 = vunpack.c.l.b16 %v468
          %v508 = vunpack.c.l.b16 %v469
          %v509 = vunpack.c.l.b16 %v470
          %v510 = vunpack.c.l.b16 %v471
          %v511 = vunpack.c.l.b16 %v472
          %v512 = vunpack.c.l.b16 %v473
          %v513 = vunpack.c.l.b16 %v474
          %v514 = vpack.c.b16 %v507, %v506
          %v515 = vpack.c.b16 %v509, %v508
          %v516 = vpack.c.b16 %v511, %v510
          %v517 = vpack.c.b16 %v513, %v512
          %v538 = vunpack.c.l.b16 %v475
          %v539 = vunpack.c.l.b16 %v476
          %v540 = vunpack.c.l.b16 %v477
          %v541 = vunpack.c.l.b16 %v478
          %v542 = vunpack.c.l.b16 %v479
          %v543 = vunpack.c.l.b16 %v480
          %v544 = vunpack.c.l.b16 %v481
          %v545 = vunpack.c.l.b16 %v482
          %v546 = vunpack.c.l.b16 %v483
          %v547 = vunpack.c.l.b16 %v484
          %v548 = vunpack.c.l.b16 %v485
          %v549 = vunpack.c.l.b16 %v486
          %v550 = vunpack.c.l.b16 %v487
          %v551 = vunpack.c.l.b16 %v488
          %v552 = vunpack.c.l.b16 %v489
          %v553 = vunpack.c.l.b16 %v490
          %v554 = vpack.c.b16 %v539, %v538
          %v555 = vpack.c.b16 %v541, %v540
          %v556 = vpack.c.b16 %v543, %v542
          %v557 = vpack.c.b16 %v545, %v544
          %v558 = vpack.c.b16 %v547, %v546
          %v559 = vpack.c.b16 %v549, %v548
          %v560 = vpack.c.b16 %v551, %v550
          %v561 = vpack.c.b16 %v553, %v552
          %570 = vmatprep.subr.bf16.mxu0 0
          %571 = vmatpush1.bf16.msra.mxu0 %v554
          %572 = vmatprep.subr.bf16.mxu0 0
          %573 = vmatpush1.bf16.msra.mxu0 %v555
          %574 = vmatprep.subr.bf16.mxu0 0
          %575 = vmatpush1.bf16.msra.mxu0 %v556
          %576 = vmatprep.subr.bf16.mxu0 0
          %577 = vmatpush1.bf16.msra.mxu0 %v557
          %578 = vmatprep.subr.bf16.mxu0 0
          %579 = vmatpush1.bf16.msra.mxu0 %v558
          %580 = vmatprep.subr.bf16.mxu0 0
          %581 = vmatpush1.bf16.msra.mxu0 %v559
          %582 = vmatprep.subr.bf16.mxu0 0
          %583 = vmatpush1.bf16.msra.mxu0 %v560
          %584 = vmatprep.subr.bf16.mxu0 0
          %585 = vmatpush1.bf16.msra.mxu0 %v561
          %586 = vmatprep.subr.bf16.mxu0 0
          %587 = vmatpush1.bf16.msra.mxu0 0
          %588 = vmatprep.subr.bf16.mxu0 0
          %589 = vmatpush1.bf16.msra.mxu0 0
          %590 = vmatprep.subr.bf16.mxu0 0
          %591 = vmatpush1.bf16.msra.mxu0 0
          %592 = vmatprep.subr.bf16.mxu0 0
          %593 = vmatpush1.bf16.msra.mxu0 0
          %594 = vmatprep.subr.bf16.mxu0 0
          %595 = vmatpush1.bf16.msra.mxu0 0
          %596 = vmatprep.subr.bf16.mxu0 0
          %597 = vmatpush1.bf16.msra.mxu0 0
          %598 = vmatprep.subr.bf16.mxu0 0
          %599 = vmatpush1.bf16.msra.mxu0 0
          %600 = vmatprep.subr.bf16.mxu0 0
          %601 = vmatpush1.bf16.msra.mxu0 0
          %602 = vmatprep.mubr.bf16.mxu0 0
          %603 = vmatmul.mubr.bf16.gmra.mrb[0].mxu0 %v514
          %v604 = vpop.f32.mrb[0].mxu0
          %v605 = vadd.f32 %v496, %v604
          %v606 = vpop.f32.mrb[0].mxu0
          %v607 = vpop.f32.mrb[0].mxu0
          %v608 = vadd.f32 %v496, %v607
          %v609 = vpop.f32.mrb[0].mxu0
          %610 = vmatprep.mubr.bf16.mxu0 0
          %611 = vmatmul.mubr.bf16.gmra.mrb[0].mxu0 %v515
          %v612 = vpop.f32.mrb[0].mxu0
          %v613 = vadd.f32 %v496, %v612
          %v614 = vpop.f32.mrb[0].mxu0
          %v615 = vpop.f32.mrb[0].mxu0
          %v616 = vadd.f32 %v496, %v615
          %v617 = vpop.f32.mrb[0].mxu0
          %618 = vmatprep.mubr.bf16.mxu0 0
          %619 = vmatmul.mubr.bf16.gmra.mrb[0].mxu0 %v516
          %v620 = vpop.f32.mrb[0].mxu0
          %v621 = vadd.f32 %v496, %v620
          %v622 = vpop.f32.mrb[0].mxu0
          %v623 = vpop.f32.mrb[0].mxu0
          %v624 = vadd.f32 %v496, %v623
          %v625 = vpop.f32.mrb[0].mxu0
          %626 = vmatprep.mubr.bf16.mxu0 0
          %627 = vmatmul.mubr.bf16.gmra.mrb[0].mxu0 %v517
          %v628 = vpop.f32.mrb[0].mxu0
          %v629 = vadd.f32 %v496, %v628
          %v630 = vpop.f32.mrb[0].mxu0
          %v631 = vpop.f32.mrb[0].mxu0
          %v632 = vadd.f32 %v496, %v631
          %v633 = vpop.f32.mrb[0].mxu0
          %634 = vdwg.mxu0
          %635 = vst [vmem:[#allocation3] sm:$0xff] %v605
          %636 = vst [vmem:[#allocation3 + $0x8] sm:$0xff] %v608
          %637 = vst [vmem:[#allocation3 + $0x10] sm:$0xff] %v613
          %638 = vst [vmem:[#allocation3 + $0x18] sm:$0xff] %v616
          %639 = vst [vmem:[#allocation3 + $0x20] sm:$0xff] %v621
          %640 = vst [vmem:[#allocation3 + $0x28] sm:$0xff] %v624
          %641 = vst [vmem:[#allocation3 + $0x30] sm:$0xff] %v629
          %642 = vst [vmem:[#allocation3 + $0x38] sm:$0xff] %v632
        $region92: #{tpu_custom_call.1} parent=59 // pred_fallthru
          _
        %v643 = vld [vmem:[#allocation2] sm:$0xff]
        %v644 = vpack.c.bf16 %v643, %v643
        %v645 = vld [vmem:[#allocation10] sm:$0xf]
        %v646 = vld [vmem:[#allocation10 + $0x4] sm:$0xf]
        %v647 = vld [vmem:[#allocation10 + $0x8] sm:$0xf]
        %v648 = vld [vmem:[#allocation10 + $0xc] sm:$0xf]
        %v649 = vld [vmem:[#allocation10 + $0x10] sm:$0xf]
        %v650 = vld [vmem:[#allocation10 + $0x14] sm:$0xf]
        %v651 = vld [vmem:[#allocation10 + $0x18] sm:$0xf]
        %v652 = vld [vmem:[#allocation10 + $0x1c] sm:$0xf]
        %v653 = vld [vmem:[#allocation10 + $0x20] sm:$0xf]
        %v654 = vld [vmem:[#allocation10 + $0x24] sm:$0xf]
        %v655 = vld [vmem:[#allocation10 + $0x28] sm:$0xf]
        %v656 = vld [vmem:[#allocation10 + $0x2c] sm:$0xf]
        %v657 = vld [vmem:[#allocation10 + $0x30] sm:$0xf]
        %v658 = vld [vmem:[#allocation10 + $0x34] sm:$0xf]
        %v659 = vld [vmem:[#allocation10 + $0x38] sm:$0xf]
        %v660 = vld [vmem:[#allocation10 + $0x3c] sm:$0xf]
        %v677 = vunpack.c.l.b16 %v645
        %v678 = vunpack.c.l.b16 %v646
        %v679 = vunpack.c.l.b16 %v647
        %v680 = vunpack.c.l.b16 %v648
        %v681 = vunpack.c.l.b16 %v649
        %v682 = vunpack.c.l.b16 %v650
        %v683 = vunpack.c.l.b16 %v651
        %v684 = vunpack.c.l.b16 %v652
        %v685 = vunpack.c.l.b16 %v653
        %v686 = vunpack.c.l.b16 %v654
        %v687 = vunpack.c.l.b16 %v655
        %v688 = vunpack.c.l.b16 %v656
        %v689 = vunpack.c.l.b16 %v657
        %v690 = vunpack.c.l.b16 %v658
        %v691 = vunpack.c.l.b16 %v659
        %v692 = vunpack.c.l.b16 %v660
        %v693 = vpack.c.b16 %v678, %v677
        %v694 = vpack.c.b16 %v680, %v679
        %v695 = vpack.c.b16 %v682, %v681
        %v696 = vpack.c.b16 %v684, %v683
        %v697 = vpack.c.b16 %v686, %v685
        %v698 = vpack.c.b16 %v688, %v687
        %v699 = vpack.c.b16 %v690, %v689
        %v700 = vpack.c.b16 %v692, %v691
        %709 = vmatprep.subr.bf16.mxu0 0
        %710 = vmatpush1.bf16.msra.mxu0 %v693
        %711 = vmatprep.subr.bf16.mxu0 0
        %712 = vmatpush1.bf16.msra.mxu0 %v694
        %713 = vmatprep.subr.bf16.mxu0 0
        %714 = vmatpush1.bf16.msra.mxu0 %v695
        %715 = vmatprep.subr.bf16.mxu0 0
        %716 = vmatpush1.bf16.msra.mxu0 %v696
        %717 = vmatprep.subr.bf16.mxu0 0
        %718 = vmatpush1.bf16.msra.mxu0 %v697
        %719 = vmatprep.subr.bf16.mxu0 0
        %720 = vmatpush1.bf16.msra.mxu0 %v698
        %721 = vmatprep.subr.bf16.mxu0 0
        %722 = vmatpush1.bf16.msra.mxu0 %v699
        %723 = vmatprep.subr.bf16.mxu0 0
        %724 = vmatpush1.bf16.msra.mxu0 %v700
        %725 = vmatprep.subr.bf16.mxu0 0
        %726 = vmatpush1.bf16.msra.mxu0 0
        %727 = vmatprep.subr.bf16.mxu0 0
        %728 = vmatpush1.bf16.msra.mxu0 0
        %729 = vmatprep.subr.bf16.mxu0 0
        %730 = vmatpush1.bf16.msra.mxu0 0
        %731 = vmatprep.subr.bf16.mxu0 0
        %732 = vmatpush1.bf16.msra.mxu0 0
        %733 = vmatprep.subr.bf16.mxu0 0
        %734 = vmatpush1.bf16.msra.mxu0 0
        %735 = vmatprep.subr.bf16.mxu0 0
        %736 = vmatpush1.bf16.msra.mxu0 0
        %737 = vmatprep.subr.bf16.mxu0 0
        %738 = vmatpush1.bf16.msra.mxu0 0
        %739 = vmatprep.subr.bf16.mxu0 0
        %740 = vmatpush1.bf16.msra.mxu0 0
        %741 = vmatprep.mubr.bf16.mxu0 0
        %742 = vmatmul.mubr.bf16.gmra.mrb[0].mxu0 %v644
        %v743 = vpop.f32.mrb[0].mxu0
        %v744 = vadd.f32 0.0, %v743
        %v745 = vpop.f32.mrb[0].mxu0
        %v746 = vpop.f32.mrb[0].mxu0
        %v747 = vpop.f32.mrb[0].mxu0
        %748 = vdwg.mxu0
        %v750 = vcombine.high %v744, %v744
        %v752 = vunpack.c.l.s4 1966171168
        %v753 = vunpack.c.0.s8 %v752
        %v754 = vlaneseq
        %v755 = vshrl.u32 %v754, 7
        %v756 = vsub.s32 %v753, %v755
        %v757 = vrot.slane %v744, %v756
        %v759 = vunpack.c.l.s4 1966171168
        %v760 = vunpack.c.0.s8 %v759
        %v761 = vlaneseq
        %v762 = vshrl.u32 %v761, 7
        %v763 = vsub.s32 %v760, %v762
        %v764 = vrot.slane %v750, %v763
        %v765 = vcombine.high %v757, %v757
        %v766 = vcombine.high %v764, %v764
        %v768 = vunpack.c.l.s4 1966171168
        %v769 = vunpack.c.0.s8 %v768
        %v770 = vlaneseq
        %v771 = vshrl.u32 %v770, 7
        %v772 = vsub.s32 %v769, %v771
        %v773 = vrot.slane %v757, %v772
        %v775 = vunpack.c.l.s4 1966171168
        %v776 = vunpack.c.0.s8 %v775
        %v777 = vlaneseq
        %v778 = vshrl.u32 %v777, 7
        %v779 = vsub.s32 %v776, %v778
        %v780 = vrot.slane %v764, %v779
        %v782 = vunpack.c.l.s4 1966171168
        %v783 = vunpack.c.0.s8 %v782
        %v784 = vlaneseq
        %v785 = vshrl.u32 %v784, 7
        %v786 = vsub.s32 %v783, %v785
        %v787 = vrot.slane %v765, %v786
        %v789 = vunpack.c.l.s4 1966171168
        %v790 = vunpack.c.0.s8 %v789
        %v791 = vlaneseq
        %v792 = vshrl.u32 %v791, 7
        %v793 = vsub.s32 %v790, %v792
        %v794 = vrot.slane %v766, %v793
        %v795 = vcombine.high %v773, %v773
        %v796 = vcombine.high %v780, %v780
        %v797 = vcombine.high %v787, %v787
        %v798 = vcombine.high %v794, %v794
        %v799 = vld [vmem:[%s6] sm:$0x1]
        %v800 = vld [vmem:[#allocation3] sm:$0xff]
        %v801 = vld [vmem:[#allocation3 + $0x8] sm:$0xff]
        %v802 = vld [vmem:[#allocation3 + $0x10] sm:$0xff]
        %v803 = vld [vmem:[#allocation3 + $0x18] sm:$0xff]
        %v804 = vld [vmem:[#allocation3 + $0x20] sm:$0xff]
        %v805 = vld [vmem:[#allocation3 + $0x28] sm:$0xff]
        %v806 = vld [vmem:[#allocation3 + $0x30] sm:$0xff]
        %v807 = vld [vmem:[#allocation3 + $0x38] sm:$0xff]
        %v808 = vlaneseq
        %v809 = vshrl.u32 %v808, 7
        %v810 = vsub.s32 0, %v809
        %v811 = vrot.slane %v773, %v810
        %v812 = vlaneseq
        %v813 = vshrl.u32 %v812, 7
        %v814 = vsub.s32 0, %v813
        %v815 = vrot.slane %v787, %v814
        %v816 = vlaneseq
        %v817 = vshrl.u32 %v816, 7
        %v818 = vsub.s32 0, %v817
        %v819 = vrot.slane %v795, %v818
        %v820 = vlaneseq
        %v821 = vshrl.u32 %v820, 7
        %v822 = vsub.s32 0, %v821
        %v823 = vrot.slane %v797, %v822
        %v824 = vlaneseq
        %v825 = vshrl.u32 %v824, 7
        %v826 = vsub.s32 0, %v825
        %v827 = vrot.slane %v780, %v826
        %v828 = vlaneseq
        %v829 = vshrl.u32 %v828, 7
        %v830 = vsub.s32 0, %v829
        %v831 = vrot.slane %v794, %v830
        %v832 = vlaneseq
        %v833 = vshrl.u32 %v832, 7
        %v834 = vsub.s32 0, %v833
        %v835 = vrot.slane %v796, %v834
        %v836 = vlaneseq
        %v837 = vshrl.u32 %v836, 7
        %v838 = vsub.s32 0, %v837
        %v839 = vrot.slane %v798, %v838
        %v848 = vadd.f32 %v811, %v800
        %v849 = vadd.f32 %v815, %v801
        %v850 = vadd.f32 %v819, %v802
        %v851 = vadd.f32 %v823, %v803
        %v852 = vadd.f32 %v827, %v804
        %v853 = vadd.f32 %v831, %v805
        %v854 = vadd.f32 %v835, %v806
        %v855 = vadd.f32 %v839, %v807
        %v856 = vtanh.pop %v848
        %v857 = vtanh.pop %v849
        %v858 = vtanh.pop %v850
        %v859 = vtanh.pop %v851
        %v860 = vtanh.pop %v852
        %v861 = vtanh.pop %v853
        %v862 = vtanh.pop %v854
        %v863 = vtanh.pop %v855
        %v865 = vlaneseq
        %v866 = vshrl.u32 %v865, 7
        %v867 = vsub.s32 0, %v866
        %v868 = vrot.slane %v799, %v867
        %v870 = vmul.f32 %v856, %v868
        %v871 = vmul.f32 %v857, %v868
        %v872 = vmul.f32 %v858, %v868
        %v873 = vmul.f32 %v859, %v868
        %v874 = vmul.f32 %v860, %v868
        %v875 = vmul.f32 %v861, %v868
        %v876 = vmul.f32 %v862, %v868
        %v877 = vmul.f32 %v863, %v868
        %878 = vadd.xlane.f32.xlu0 %v870
        %v879 = vpop.xlane.xlu0 %878
        %880 = vadd.xlane.f32.xlu0 %v871
        %v881 = vpop.xlane.xlu0 %880
        %882 = vadd.xlane.f32.xlu0 %v872
        %v883 = vpop.xlane.xlu0 %882
        %884 = vadd.xlane.f32.xlu0 %v873
        %v885 = vpop.xlane.xlu0 %884
        %886 = vadd.xlane.f32.xlu0 %v874
        %v887 = vpop.xlane.xlu0 %886
        %888 = vadd.xlane.f32.xlu0 %v875
        %v889 = vpop.xlane.xlu0 %888
        %890 = vadd.xlane.f32.xlu0 %v876
        %v891 = vpop.xlane.xlu0 %890
        %892 = vadd.xlane.f32.xlu0 %v877
        %v893 = vpop.xlane.xlu0 %892
        %v894 = vld [vmem:[#allocation9] sm:$0xff]
        %vm895 = vcmp.gt.f32.partialorder %v894, 0.5
        %v904 = vlaneseq
        %v905 = vand.u32 %v904, 127
        %v906 = vlaneseq
        %v907 = vshrl.u32 %v906, 7
        %v908 = vsub.s32 %v905, %v907
        %v909 = vrot.slane %v879, %v908
        %v910 = vlaneseq
        %v911 = vshrl.u32 %v910, 7
        %v912 = vsub.s32 %v905, %v911
        %v913 = vrot.slane %v881, %v912
        %v914 = vlaneseq
        %v915 = vshrl.u32 %v914, 7
        %v916 = vsub.s32 %v905, %v915
        %v917 = vrot.slane %v883, %v916
        %v918 = vlaneseq
        %v919 = vshrl.u32 %v918, 7
        %v920 = vsub.s32 %v905, %v919
        %v921 = vrot.slane %v885, %v920
        %v922 = vlaneseq
        %v923 = vshrl.u32 %v922, 7
        %v924 = vsub.s32 %v905, %v923
        %v925 = vrot.slane %v887, %v924
        %v926 = vlaneseq
        %v927 = vshrl.u32 %v926, 7
        %v928 = vsub.s32 %v905, %v927
        %v929 = vrot.slane %v889, %v928
        %v930 = vlaneseq
        %v931 = vshrl.u32 %v930, 7
        %v932 = vsub.s32 %v905, %v931
        %v933 = vrot.slane %v891, %v932
        %v934 = vlaneseq
        %v935 = vshrl.u32 %v934, 7
        %v936 = vsub.s32 %v905, %v935
        %v937 = vrot.slane %v893, %v936
        %vm938 = vcmask 1041409
        %v939 = vsel %vm938, %v913, %v909
        %vm940 = vcmask 1042434
        %v941 = vsel %vm940, %v917, %v939
        %vm942 = vcmask 1043459
        %v943 = vsel %vm942, %v921, %v941
        %vm944 = vcmask 1044484
        %v945 = vsel %vm944, %v925, %v943
        %vm946 = vcmask 1045509
        %v947 = vsel %vm946, %v929, %v945
        %vm948 = vcmask 1046534
        %v949 = vsel %vm948, %v933, %v947
        %vm950 = vcmask 1047559
        %v951 = vsel %vm950, %v937, %v949
        %v953 = vsel %vm895, -1e+18, %v951
        %vm954 = vcmask 64512
        %v955 = vsel %vm954, %v953, -inf
        %956 = vmax.xlane.f32.xlu0 %v955
        %v957 = vpop.xlane.xlu0 %956
        %v958 = vsub.f32 %v953, %v957
        %v959 = vmul.f32 %v958, 1.442695
        %v960 = vpow.pop %v959
        %v961 = vsel %vm954, %v960, 0.0
        %962 = vadd.xlane.f32.xlu0 %v961
        %v963 = vpop.xlane.xlu0 %962
        %v964 = vrcp.pop %v963
        %v965 = vmul.f32 %v960, %v964
        %v967 = vcombine.high %v965, %v965
        %v969 = vunpack.c.l.s4 1966171168
        %v970 = vunpack.c.0.s8 %v969
        %v971 = vlaneseq
        %v972 = vshrl.u32 %v971, 7
        %v973 = vsub.s32 %v970, %v972
        %v974 = vrot.slane %v965, %v973
        %v976 = vunpack.c.l.s4 1966171168
        %v977 = vunpack.c.0.s8 %v976
        %v978 = vlaneseq
        %v979 = vshrl.u32 %v978, 7
        %v980 = vsub.s32 %v977, %v979
        %v981 = vrot.slane %v967, %v980
        %v982 = vcombine.high %v974, %v974
        %v983 = vcombine.high %v981, %v981
        %v985 = vunpack.c.l.s4 1966171168
        %v986 = vunpack.c.0.s8 %v985
        %v987 = vlaneseq
        %v988 = vshrl.u32 %v987, 7
        %v989 = vsub.s32 %v986, %v988
        %v990 = vrot.slane %v974, %v989
        %v992 = vunpack.c.l.s4 1966171168
        %v993 = vunpack.c.0.s8 %v992
        %v994 = vlaneseq
        %v995 = vshrl.u32 %v994, 7
        %v996 = vsub.s32 %v993, %v995
        %v997 = vrot.slane %v981, %v996
        %v999 = vunpack.c.l.s4 1966171168
        %v1000 = vunpack.c.0.s8 %v999
        %v1001 = vlaneseq
        %v1002 = vshrl.u32 %v1001, 7
        %v1003 = vsub.s32 %v1000, %v1002
        %v1004 = vrot.slane %v982, %v1003
        %v1006 = vunpack.c.l.s4 1966171168
        %v1007 = vunpack.c.0.s8 %v1006
        %v1008 = vlaneseq
        %v1009 = vshrl.u32 %v1008, 7
        %v1010 = vsub.s32 %v1007, %v1009
        %v1011 = vrot.slane %v983, %v1010
        %v1012 = vcombine.high %v990, %v990
        %v1013 = vcombine.high %v997, %v997
        %v1014 = vcombine.high %v1004, %v1004
        %v1015 = vcombine.high %v1011, %v1011
        %v1024 = vpack.c.bf16 %v990, %v990
        %v1025 = vpack.c.bf16 %v1004, %v1004
        %v1026 = vpack.c.bf16 %v1012, %v1012
        %v1027 = vpack.c.bf16 %v1014, %v1014
        %v1028 = vpack.c.bf16 %v997, %v997
        %v1029 = vpack.c.bf16 %v1011, %v1011
        %v1030 = vpack.c.bf16 %v1013, %v1013
        %v1031 = vpack.c.bf16 %v1015, %v1015
        %v1032 = vld [vmem:[#allocation7] sm:$0xf]
        %v1033 = vld [vmem:[#allocation7 + $0x4] sm:$0xf]
        %v1034 = vld [vmem:[#allocation7 + $0x8] sm:$0xf]
        %v1035 = vld [vmem:[#allocation7 + $0xc] sm:$0xf]
        %v1036 = vld [vmem:[#allocation7 + $0x10] sm:$0xf]
        %v1037 = vld [vmem:[#allocation7 + $0x14] sm:$0xf]
        %v1038 = vld [vmem:[#allocation7 + $0x18] sm:$0xf]
        %v1039 = vld [vmem:[#allocation7 + $0x1c] sm:$0xf]
        %v1041 = vsel %vm954, %v1024, 0
        %vm1043 = vcmask 1043456
        %v1045 = vsel %vm1043, %v1032, 0
        %1047 = vmatprep.subr.bf16.mxu0 0
        %1048 = vmatpush1.bf16.msra.mxu0 %v1045
        %1049 = vmatprep.subr.bf16.mxu0 0
        %1050 = vmatpush1.bf16.msra.mxu0 0
        %1051 = vmatprep.subr.bf16.mxu0 0
        %1052 = vmatpush1.bf16.msra.mxu0 0
        %1053 = vmatprep.subr.bf16.mxu0 0
        %1054 = vmatpush1.bf16.msra.mxu0 0
        %1055 = vmatprep.subr.bf16.mxu0 0
        %1056 = vmatpush1.bf16.msra.mxu0 0
        %1057 = vmatprep.subr.bf16.mxu0 0
        %1058 = vmatpush1.bf16.msra.mxu0 0
        %1059 = vmatprep.subr.bf16.mxu0 0
        %1060 = vmatpush1.bf16.msra.mxu0 0
        %1061 = vmatprep.subr.bf16.mxu0 0
        %1062 = vmatpush1.bf16.msra.mxu0 0
        %1063 = vmatprep.subr.bf16.mxu0 0
        %1064 = vmatpush1.bf16.msra.mxu0 0
        %1065 = vmatprep.subr.bf16.mxu0 0
        %1066 = vmatpush1.bf16.msra.mxu0 0
        %1067 = vmatprep.subr.bf16.mxu0 0
        %1068 = vmatpush1.bf16.msra.mxu0 0
        %1069 = vmatprep.subr.bf16.mxu0 0
        %1070 = vmatpush1.bf16.msra.mxu0 0
        %1071 = vmatprep.subr.bf16.mxu0 0
        %1072 = vmatpush1.bf16.msra.mxu0 0
        %1073 = vmatprep.subr.bf16.mxu0 0
        %1074 = vmatpush1.bf16.msra.mxu0 0
        %1075 = vmatprep.subr.bf16.mxu0 0
        %1076 = vmatpush1.bf16.msra.mxu0 0
        %1077 = vmatprep.subr.bf16.mxu0 0
        %1078 = vmatpush1.bf16.msra.mxu0 0
        %1079 = vmatprep.mubr.bf16.mxu0 0
        %1080 = vmatmul.mubr.bf16.gmra.mrb[0].mxu0 %v1041
        %v1081 = vpop.f32.mrb[0].mxu0
        %v1082 = vadd.f32 0.0, %v1081
        %v1083 = vpop.f32.mrb[0].mxu0
        %v1084 = vpop.f32.mrb[0].mxu0
        %v1085 = vpop.f32.mrb[0].mxu0
        %1086 = vdwg.mxu0
        %v1088 = vsel %vm954, %v1025, 0
        %v1091 = vsel %vm1043, %v1033, 0
        %1093 = vmatprep.subr.bf16.mxu0 0
        %1094 = vmatpush1.bf16.msra.mxu0 %v1091
        %1095 = vmatprep.subr.bf16.mxu0 0
        %1096 = vmatpush1.bf16.msra.mxu0 0
        %1097 = vmatprep.subr.bf16.mxu0 0
        %1098 = vmatpush1.bf16.msra.mxu0 0
        %1099 = vmatprep.subr.bf16.mxu0 0
        %1100 = vmatpush1.bf16.msra.mxu0 0
        %1101 = vmatprep.subr.bf16.mxu0 0
        %1102 = vmatpush1.bf16.msra.mxu0 0
        %1103 = vmatprep.subr.bf16.mxu0 0
        %1104 = vmatpush1.bf16.msra.mxu0 0
        %1105 = vmatprep.subr.bf16.mxu0 0
        %1106 = vmatpush1.bf16.msra.mxu0 0
        %1107 = vmatprep.subr.bf16.mxu0 0
        %1108 = vmatpush1.bf16.msra.mxu0 0
        %1109 = vmatprep.subr.bf16.mxu0 0
        %1110 = vmatpush1.bf16.msra.mxu0 0
        %1111 = vmatprep.subr.bf16.mxu0 0
        %1112 = vmatpush1.bf16.msra.mxu0 0
        %1113 = vmatprep.subr.bf16.mxu0 0
        %1114 = vmatpush1.bf16.msra.mxu0 0
        %1115 = vmatprep.subr.bf16.mxu0 0
        %1116 = vmatpush1.bf16.msra.mxu0 0
        %1117 = vmatprep.subr.bf16.mxu0 0
        %1118 = vmatpush1.bf16.msra.mxu0 0
        %1119 = vmatprep.subr.bf16.mxu0 0
        %1120 = vmatpush1.bf16.msra.mxu0 0
        %1121 = vmatprep.subr.bf16.mxu0 0
        %1122 = vmatpush1.bf16.msra.mxu0 0
        %1123 = vmatprep.subr.bf16.mxu0 0
        %1124 = vmatpush1.bf16.msra.mxu0 0
        %1125 = vmatprep.mubr.bf16.mxu0 0
        %1126 = vmatmul.mubr.bf16.gmra.mrb[0].mxu0 %v1088
        %v1127 = vpop.f32.mrb[0].mxu0
        %v1128 = vadd.f32 0.0, %v1127
        %v1129 = vpop.f32.mrb[0].mxu0
        %v1130 = vpop.f32.mrb[0].mxu0
        %v1131 = vpop.f32.mrb[0].mxu0
        %1132 = vdwg.mxu0
        %v1134 = vsel %vm954, %v1026, 0
        %v1137 = vsel %vm1043, %v1034, 0
        %1139 = vmatprep.subr.bf16.mxu0 0
        %1140 = vmatpush1.bf16.msra.mxu0 %v1137
        %1141 = vmatprep.subr.bf16.mxu0 0
        %1142 = vmatpush1.bf16.msra.mxu0 0
        %1143 = vmatprep.subr.bf16.mxu0 0
        %1144 = vmatpush1.bf16.msra.mxu0 0
        %1145 = vmatprep.subr.bf16.mxu0 0
        %1146 = vmatpush1.bf16.msra.mxu0 0
        %1147 = vmatprep.subr.bf16.mxu0 0
        %1148 = vmatpush1.bf16.msra.mxu0 0
        %1149 = vmatprep.subr.bf16.mxu0 0
        %1150 = vmatpush1.bf16.msra.mxu0 0
        %1151 = vmatprep.subr.bf16.mxu0 0
        %1152 = vmatpush1.bf16.msra.mxu0 0
        %1153 = vmatprep.subr.bf16.mxu0 0
        %1154 = vmatpush1.bf16.msra.mxu0 0
        %1155 = vmatprep.subr.bf16.mxu0 0
        %1156 = vmatpush1.bf16.msra.mxu0 0
        %1157 = vmatprep.subr.bf16.mxu0 0
        %1158 = vmatpush1.bf16.msra.mxu0 0
        %1159 = vmatprep.subr.bf16.mxu0 0
        %1160 = vmatpush1.bf16.msra.mxu0 0
        %1161 = vmatprep.subr.bf16.mxu0 0
        %1162 = vmatpush1.bf16.msra.mxu0 0
        %1163 = vmatprep.subr.bf16.mxu0 0
        %1164 = vmatpush1.bf16.msra.mxu0 0
        %1165 = vmatprep.subr.bf16.mxu0 0
        %1166 = vmatpush1.bf16.msra.mxu0 0
        %1167 = vmatprep.subr.bf16.mxu0 0
        %1168 = vmatpush1.bf16.msra.mxu0 0
        %1169 = vmatprep.subr.bf16.mxu0 0
        %1170 = vmatpush1.bf16.msra.mxu0 0
        %1171 = vmatprep.mubr.bf16.mxu0 0
        %1172 = vmatmul.mubr.bf16.gmra.mrb[0].mxu0 %v1134
        %v1173 = vpop.f32.mrb[0].mxu0
        %v1174 = vadd.f32 0.0, %v1173
        %v1175 = vpop.f32.mrb[0].mxu0
        %v1176 = vpop.f32.mrb[0].mxu0
        %v1177 = vpop.f32.mrb[0].mxu0
        %1178 = vdwg.mxu0
        %v1180 = vsel %vm954, %v1027, 0
        %v1183 = vsel %vm1043, %v1035, 0
        %1185 = vmatprep.subr.bf16.mxu0 0
        %1186 = vmatpush1.bf16.msra.mxu0 %v1183
        %1187 = vmatprep.subr.bf16.mxu0 0
        %1188 = vmatpush1.bf16.msra.mxu0 0
        %1189 = vmatprep.subr.bf16.mxu0 0
        %1190 = vmatpush1.bf16.msra.mxu0 0
        %1191 = vmatprep.subr.bf16.mxu0 0
        %1192 = vmatpush1.bf16.msra.mxu0 0
        %1193 = vmatprep.subr.bf16.mxu0 0
        %1194 = vmatpush1.bf16.msra.mxu0 0
        %1195 = vmatprep.subr.bf16.mxu0 0
        %1196 = vmatpush1.bf16.msra.mxu0 0
        %1197 = vmatprep.subr.bf16.mxu0 0
        %1198 = vmatpush1.bf16.msra.mxu0 0
        %1199 = vmatprep.subr.bf16.mxu0 0
        %1200 = vmatpush1.bf16.msra.mxu0 0
        %1201 = vmatprep.subr.bf16.mxu0 0
        %1202 = vmatpush1.bf16.msra.mxu0 0
        %1203 = vmatprep.subr.bf16.mxu0 0
        %1204 = vmatpush1.bf16.msra.mxu0 0
        %1205 = vmatprep.subr.bf16.mxu0 0
        %1206 = vmatpush1.bf16.msra.mxu0 0
        %1207 = vmatprep.subr.bf16.mxu0 0
        %1208 = vmatpush1.bf16.msra.mxu0 0
        %1209 = vmatprep.subr.bf16.mxu0 0
        %1210 = vmatpush1.bf16.msra.mxu0 0
        %1211 = vmatprep.subr.bf16.mxu0 0
        %1212 = vmatpush1.bf16.msra.mxu0 0
        %1213 = vmatprep.subr.bf16.mxu0 0
        %1214 = vmatpush1.bf16.msra.mxu0 0
        %1215 = vmatprep.subr.bf16.mxu0 0
        %1216 = vmatpush1.bf16.msra.mxu0 0
        %1217 = vmatprep.mubr.bf16.mxu0 0
        %1218 = vmatmul.mubr.bf16.gmra.mrb[0].mxu0 %v1180
        %v1219 = vpop.f32.mrb[0].mxu0
        %v1220 = vadd.f32 0.0, %v1219
        %v1221 = vpop.f32.mrb[0].mxu0
        %v1222 = vpop.f32.mrb[0].mxu0
        %v1223 = vpop.f32.mrb[0].mxu0
        %1224 = vdwg.mxu0
        %v1226 = vsel %vm954, %v1028, 0
        %v1229 = vsel %vm1043, %v1036, 0
        %1231 = vmatprep.subr.bf16.mxu0 0
        %1232 = vmatpush1.bf16.msra.mxu0 %v1229
        %1233 = vmatprep.subr.bf16.mxu0 0
        %1234 = vmatpush1.bf16.msra.mxu0 0
        %1235 = vmatprep.subr.bf16.mxu0 0
        %1236 = vmatpush1.bf16.msra.mxu0 0
        %1237 = vmatprep.subr.bf16.mxu0 0
        %1238 = vmatpush1.bf16.msra.mxu0 0
        %1239 = vmatprep.subr.bf16.mxu0 0
        %1240 = vmatpush1.bf16.msra.mxu0 0
        %1241 = vmatprep.subr.bf16.mxu0 0
        %1242 = vmatpush1.bf16.msra.mxu0 0
        %1243 = vmatprep.subr.bf16.mxu0 0
        %1244 = vmatpush1.bf16.msra.mxu0 0
        %1245 = vmatprep.subr.bf16.mxu0 0
        %1246 = vmatpush1.bf16.msra.mxu0 0
        %1247 = vmatprep.subr.bf16.mxu0 0
        %1248 = vmatpush1.bf16.msra.mxu0 0
        %1249 = vmatprep.subr.bf16.mxu0 0
        %1250 = vmatpush1.bf16.msra.mxu0 0
        %1251 = vmatprep.subr.bf16.mxu0 0
        %1252 = vmatpush1.bf16.msra.mxu0 0
        %1253 = vmatprep.subr.bf16.mxu0 0
        %1254 = vmatpush1.bf16.msra.mxu0 0
        %1255 = vmatprep.subr.bf16.mxu0 0
        %1256 = vmatpush1.bf16.msra.mxu0 0
        %1257 = vmatprep.subr.bf16.mxu0 0
        %1258 = vmatpush1.bf16.msra.mxu0 0
        %1259 = vmatprep.subr.bf16.mxu0 0
        %1260 = vmatpush1.bf16.msra.mxu0 0
        %1261 = vmatprep.subr.bf16.mxu0 0
        %1262 = vmatpush1.bf16.msra.mxu0 0
        %1263 = vmatprep.mubr.bf16.mxu0 0
        %1264 = vmatmul.mubr.bf16.gmra.mrb[0].mxu0 %v1226
        %v1265 = vpop.f32.mrb[0].mxu0
        %v1266 = vadd.f32 0.0, %v1265
        %v1267 = vpop.f32.mrb[0].mxu0
        %v1268 = vpop.f32.mrb[0].mxu0
        %v1269 = vpop.f32.mrb[0].mxu0
        %1270 = vdwg.mxu0
        %v1272 = vsel %vm954, %v1029, 0
        %v1275 = vsel %vm1043, %v1037, 0
        %1277 = vmatprep.subr.bf16.mxu0 0
        %1278 = vmatpush1.bf16.msra.mxu0 %v1275
        %1279 = vmatprep.subr.bf16.mxu0 0
        %1280 = vmatpush1.bf16.msra.mxu0 0
        %1281 = vmatprep.subr.bf16.mxu0 0
        %1282 = vmatpush1.bf16.msra.mxu0 0
        %1283 = vmatprep.subr.bf16.mxu0 0
        %1284 = vmatpush1.bf16.msra.mxu0 0
        %1285 = vmatprep.subr.bf16.mxu0 0
        %1286 = vmatpush1.bf16.msra.mxu0 0
        %1287 = vmatprep.subr.bf16.mxu0 0
        %1288 = vmatpush1.bf16.msra.mxu0 0
        %1289 = vmatprep.subr.bf16.mxu0 0
        %1290 = vmatpush1.bf16.msra.mxu0 0
        %1291 = vmatprep.subr.bf16.mxu0 0
        %1292 = vmatpush1.bf16.msra.mxu0 0
        %1293 = vmatprep.subr.bf16.mxu0 0
        %1294 = vmatpush1.bf16.msra.mxu0 0
        %1295 = vmatprep.subr.bf16.mxu0 0
        %1296 = vmatpush1.bf16.msra.mxu0 0
        %1297 = vmatprep.subr.bf16.mxu0 0
        %1298 = vmatpush1.bf16.msra.mxu0 0
        %1299 = vmatprep.subr.bf16.mxu0 0
        %1300 = vmatpush1.bf16.msra.mxu0 0
        %1301 = vmatprep.subr.bf16.mxu0 0
        %1302 = vmatpush1.bf16.msra.mxu0 0
        %1303 = vmatprep.subr.bf16.mxu0 0
        %1304 = vmatpush1.bf16.msra.mxu0 0
        %1305 = vmatprep.subr.bf16.mxu0 0
        %1306 = vmatpush1.bf16.msra.mxu0 0
        %1307 = vmatprep.subr.bf16.mxu0 0
        %1308 = vmatpush1.bf16.msra.mxu0 0
        %1309 = vmatprep.mubr.bf16.mxu0 0
        %1310 = vmatmul.mubr.bf16.gmra.mrb[0].mxu0 %v1272
        %v1311 = vpop.f32.mrb[0].mxu0
        %v1312 = vadd.f32 0.0, %v1311
        %v1313 = vpop.f32.mrb[0].mxu0
        %v1314 = vpop.f32.mrb[0].mxu0
        %v1315 = vpop.f32.mrb[0].mxu0
        %1316 = vdwg.mxu0
        %v1318 = vsel %vm954, %v1030, 0
        %v1321 = vsel %vm1043, %v1038, 0
        %1323 = vmatprep.subr.bf16.mxu0 0
        %1324 = vmatpush1.bf16.msra.mxu0 %v1321
        %1325 = vmatprep.subr.bf16.mxu0 0
        %1326 = vmatpush1.bf16.msra.mxu0 0
        %1327 = vmatprep.subr.bf16.mxu0 0
        %1328 = vmatpush1.bf16.msra.mxu0 0
        %1329 = vmatprep.subr.bf16.mxu0 0
        %1330 = vmatpush1.bf16.msra.mxu0 0
        %1331 = vmatprep.subr.bf16.mxu0 0
        %1332 = vmatpush1.bf16.msra.mxu0 0
        %1333 = vmatprep.subr.bf16.mxu0 0
        %1334 = vmatpush1.bf16.msra.mxu0 0
        %1335 = vmatprep.subr.bf16.mxu0 0
        %1336 = vmatpush1.bf16.msra.mxu0 0
        %1337 = vmatprep.subr.bf16.mxu0 0
        %1338 = vmatpush1.bf16.msra.mxu0 0
        %1339 = vmatprep.subr.bf16.mxu0 0
        %1340 = vmatpush1.bf16.msra.mxu0 0
        %1341 = vmatprep.subr.bf16.mxu0 0
        %1342 = vmatpush1.bf16.msra.mxu0 0
        %1343 = vmatprep.subr.bf16.mxu0 0
        %1344 = vmatpush1.bf16.msra.mxu0 0
        %1345 = vmatprep.subr.bf16.mxu0 0
        %1346 = vmatpush1.bf16.msra.mxu0 0
        %1347 = vmatprep.subr.bf16.mxu0 0
        %1348 = vmatpush1.bf16.msra.mxu0 0
        %1349 = vmatprep.subr.bf16.mxu0 0
        %1350 = vmatpush1.bf16.msra.mxu0 0
        %1351 = vmatprep.subr.bf16.mxu0 0
        %1352 = vmatpush1.bf16.msra.mxu0 0
        %1353 = vmatprep.subr.bf16.mxu0 0
        %1354 = vmatpush1.bf16.msra.mxu0 0
        %1355 = vmatprep.mubr.bf16.mxu0 0
        %1356 = vmatmul.mubr.bf16.gmra.mrb[0].mxu0 %v1318
        %v1357 = vpop.f32.mrb[0].mxu0
        %v1358 = vadd.f32 0.0, %v1357
        %v1359 = vpop.f32.mrb[0].mxu0
        %v1360 = vpop.f32.mrb[0].mxu0
        %v1361 = vpop.f32.mrb[0].mxu0
        %1362 = vdwg.mxu0
        %v1364 = vsel %vm954, %v1031, 0
        %v1367 = vsel %vm1043, %v1039, 0
        %1369 = vmatprep.subr.bf16.mxu0 0
        %1370 = vmatpush1.bf16.msra.mxu0 %v1367
        %1371 = vmatprep.subr.bf16.mxu0 0
        %1372 = vmatpush1.bf16.msra.mxu0 0
        %1373 = vmatprep.subr.bf16.mxu0 0
        %1374 = vmatpush1.bf16.msra.mxu0 0
        %1375 = vmatprep.subr.bf16.mxu0 0
        %1376 = vmatpush1.bf16.msra.mxu0 0
        %1377 = vmatprep.subr.bf16.mxu0 0
        %1378 = vmatpush1.bf16.msra.mxu0 0
        %1379 = vmatprep.subr.bf16.mxu0 0
        %1380 = vmatpush1.bf16.msra.mxu0 0
        %1381 = vmatprep.subr.bf16.mxu0 0
        %1382 = vmatpush1.bf16.msra.mxu0 0
        %1383 = vmatprep.subr.bf16.mxu0 0
        %1384 = vmatpush1.bf16.msra.mxu0 0
        %1385 = vmatprep.subr.bf16.mxu0 0
        %1386 = vmatpush1.bf16.msra.mxu0 0
        %1387 = vmatprep.subr.bf16.mxu0 0
        %1388 = vmatpush1.bf16.msra.mxu0 0
        %1389 = vmatprep.subr.bf16.mxu0 0
        %1390 = vmatpush1.bf16.msra.mxu0 0
        %1391 = vmatprep.subr.bf16.mxu0 0
        %1392 = vmatpush1.bf16.msra.mxu0 0
        %1393 = vmatprep.subr.bf16.mxu0 0
        %1394 = vmatpush1.bf16.msra.mxu0 0
        %1395 = vmatprep.subr.bf16.mxu0 0
        %1396 = vmatpush1.bf16.msra.mxu0 0
        %1397 = vmatprep.subr.bf16.mxu0 0
        %1398 = vmatpush1.bf16.msra.mxu0 0
        %1399 = vmatprep.subr.bf16.mxu0 0
        %1400 = vmatpush1.bf16.msra.mxu0 0
        %1401 = vmatprep.mubr.bf16.mxu0 0
        %1402 = vmatmul.mubr.bf16.gmra.mrb[0].mxu0 %v1364
        %v1403 = vpop.f32.mrb[0].mxu0
        %v1404 = vadd.f32 0.0, %v1403
        %v1405 = vpop.f32.mrb[0].mxu0
        %v1406 = vpop.f32.mrb[0].mxu0
        %v1407 = vpop.f32.mrb[0].mxu0
        %1408 = vdwg.mxu0
        %v1409 = vld [vmem:[%s400] sm:$0xff]
        %v1410 = vld [vmem:[%s400 + $0x8] sm:$0xff]
        %v1411 = vld [vmem:[%s400 + $0x10] sm:$0xff]
        %v1412 = vpack.c.bf16 %v1082, %v1082
        %v1413 = vpack.c.bf16 %v1128, %v1128
        %v1414 = vpack.c.bf16 %v1174, %v1174
        %v1415 = vpack.c.bf16 %v1220, %v1220
        %v1416 = vpack.c.bf16 %v1266, %v1266
        %v1417 = vpack.c.bf16 %v1312, %v1312
        %v1418 = vpack.c.bf16 %v1358, %v1358
        %v1419 = vpack.c.bf16 %v1404, %v1404
        %v1420 = vld [vmem:[#allocation13] sm:$0xff]
        %v1421 = vld [vmem:[#allocation13 + $0x8] sm:$0xf]
        %v1422 = vld [vmem:[#allocation13 + $0xc] sm:$0xff]
        %v1423 = vld [vmem:[#allocation13 + $0x14] sm:$0xf]
        %v1424 = vld [vmem:[#allocation13 + $0x18] sm:$0xff]
        %v1425 = vld [vmem:[#allocation13 + $0x20] sm:$0xf]
        %v1426 = vld [vmem:[#allocation13 + $0x24] sm:$0xff]
        %v1427 = vld [vmem:[#allocation13 + $0x2c] sm:$0xf]
        %v1428 = vld [vmem:[#allocation13 + $0x30] sm:$0xff]
        %v1429 = vld [vmem:[#allocation13 + $0x38] sm:$0xf]
        %v1430 = vld [vmem:[#allocation13 + $0x3c] sm:$0xff]
        %v1431 = vld [vmem:[#allocation13 + $0x44] sm:$0xf]
        %v1432 = vld [vmem:[#allocation13 + $0x48] sm:$0xff]
        %v1433 = vld [vmem:[#allocation13 + $0x50] sm:$0xf]
        %v1434 = vld [vmem:[#allocation13 + $0x54] sm:$0xff]
        %v1435 = vld [vmem:[#allocation13 + $0x5c] sm:$0xf]
        %v1436 = vld [vmem:[#allocation13 + $0x60] sm:$0xff]
        %v1437 = vld [vmem:[#allocation13 + $0x68] sm:$0xf]
        %v1438 = vld [vmem:[#allocation13 + $0x6c] sm:$0xff]
        %v1439 = vld [vmem:[#allocation13 + $0x74] sm:$0xf]
        %v1440 = vld [vmem:[#allocation13 + $0x78] sm:$0xff]
        %v1441 = vld [vmem:[#allocation13 + $0x80] sm:$0xf]
        %v1442 = vld [vmem:[#allocation13 + $0x84] sm:$0xff]
        %v1443 = vld [vmem:[#allocation13 + $0x8c] sm:$0xf]
        %v1444 = vld [vmem:[#allocation13 + $0x90] sm:$0xff]
        %v1445 = vld [vmem:[#allocation13 + $0x98] sm:$0xf]
        %v1446 = vld [vmem:[#allocation13 + $0x9c] sm:$0xff]
        %v1447 = vld [vmem:[#allocation13 + $0xa4] sm:$0xf]
        %v1448 = vld [vmem:[#allocation13 + $0xa8] sm:$0xff]
        %v1449 = vld [vmem:[#allocation13 + $0xb0] sm:$0xf]
        %v1450 = vld [vmem:[#allocation13 + $0xb4] sm:$0xff]
        %v1451 = vld [vmem:[#allocation13 + $0xbc] sm:$0xf]
        %v1460 = vunpack.c.l.b16 %v1412
        %v1461 = vunpack.c.l.b16 %v1413
        %v1462 = vunpack.c.l.b16 %v1414
        %v1463 = vunpack.c.l.b16 %v1415
        %v1464 = vunpack.c.l.b16 %v1416
        %v1465 = vunpack.c.l.b16 %v1417
        %v1466 = vunpack.c.l.b16 %v1418
        %v1467 = vunpack.c.l.b16 %v1419
        %v1468 = vrot.slane %v1461, 7
        %v1469 = vsel %vm938, %v1468, %v1460
        %v1470 = vrot.slane %v1462, 6
        %v1471 = vsel %vm940, %v1470, %v1469
        %v1472 = vrot.slane %v1463, 5
        %v1473 = vsel %vm942, %v1472, %v1471
        %v1474 = vrot.slane %v1464, 4
        %v1475 = vsel %vm944, %v1474, %v1473
        %v1476 = vrot.slane %v1465, 3
        %v1477 = vsel %vm946, %v1476, %v1475
        %v1478 = vrot.slane %v1466, 2
        %v1479 = vsel %vm948, %v1478, %v1477
        %v1480 = vrot.slane %v1467, 1
        %v1481 = vsel %vm950, %v1480, %v1479
        %v1482 = vpack.c.b16 %v1481, %v1481
        %v1516 = vunpack.c.l.b16 %v1420
        %v1517 = vunpack.c.h.b16 %v1420
        %v1518 = vunpack.c.l.b16 %v1421
        %v1519 = vunpack.c.l.b16 %v1422
        %v1520 = vunpack.c.h.b16 %v1422
        %v1521 = vunpack.c.l.b16 %v1423
        %v1522 = vunpack.c.l.b16 %v1424
        %v1523 = vunpack.c.h.b16 %v1424
        %v1524 = vunpack.c.l.b16 %v1425
        %v1525 = vunpack.c.l.b16 %v1426
        %v1526 = vunpack.c.h.b16 %v1426
        %v1527 = vunpack.c.l.b16 %v1427
        %v1528 = vunpack.c.l.b16 %v1428
        %v1529 = vunpack.c.h.b16 %v1428
        %v1530 = vunpack.c.l.b16 %v1429
        %v1531 = vunpack.c.l.b16 %v1430
        %v1532 = vunpack.c.h.b16 %v1430
        %v1533 = vunpack.c.l.b16 %v1431
        %v1534 = vunpack.c.l.b16 %v1432
        %v1535 = vunpack.c.h.b16 %v1432
        %v1536 = vunpack.c.l.b16 %v1433
        %v1537 = vunpack.c.l.b16 %v1434
        %v1538 = vunpack.c.h.b16 %v1434
        %v1539 = vunpack.c.l.b16 %v1435
        %v1540 = vunpack.c.l.b16 %v1436
        %v1541 = vunpack.c.h.b16 %v1436
        %v1542 = vunpack.c.l.b16 %v1437
        %v1543 = vunpack.c.l.b16 %v1438
        %v1544 = vunpack.c.h.b16 %v1438
        %v1545 = vunpack.c.l.b16 %v1439
        %v1546 = vunpack.c.l.b16 %v1440
        %v1547 = vunpack.c.h.b16 %v1440
        %v1548 = vunpack.c.l.b16 %v1441
        %v1549 = vunpack.c.l.b16 %v1442
        %v1550 = vunpack.c.h.b16 %v1442
        %v1551 = vunpack.c.l.b16 %v1443
        %v1552 = vunpack.c.l.b16 %v1444
        %v1553 = vunpack.c.h.b16 %v1444
        %v1554 = vunpack.c.l.b16 %v1445
        %v1555 = vunpack.c.l.b16 %v1446
        %v1556 = vunpack.c.h.b16 %v1446
        %v1557 = vunpack.c.l.b16 %v1447
        %v1558 = vunpack.c.l.b16 %v1448
        %v1559 = vunpack.c.h.b16 %v1448
        %v1560 = vunpack.c.l.b16 %v1449
        %v1561 = vunpack.c.l.b16 %v1450
        %v1562 = vunpack.c.h.b16 %v1450
        %v1563 = vunpack.c.l.b16 %v1451
        %v1564 = vpack.c.b16 %v1519, %v1516
        %v1565 = vpack.c.b16 %v1520, %v1517
        %v1566 = vpack.c.b16 %v1521, %v1518
        %v1567 = vpack.c.b16 %v1525, %v1522
        %v1568 = vpack.c.b16 %v1526, %v1523
        %v1569 = vpack.c.b16 %v1527, %v1524
        %v1570 = vpack.c.b16 %v1531, %v1528
        %v1571 = vpack.c.b16 %v1532, %v1529
        %v1572 = vpack.c.b16 %v1533, %v1530
        %v1573 = vpack.c.b16 %v1537, %v1534
        %v1574 = vpack.c.b16 %v1538, %v1535
        %v1575 = vpack.c.b16 %v1539, %v1536
        %v1576 = vpack.c.b16 %v1543, %v1540
        %v1577 = vpack.c.b16 %v1544, %v1541
        %v1578 = vpack.c.b16 %v1545, %v1542
        %v1579 = vpack.c.b16 %v1549, %v1546
        %v1580 = vpack.c.b16 %v1550, %v1547
        %v1581 = vpack.c.b16 %v1551, %v1548
        %v1582 = vpack.c.b16 %v1555, %v1552
        %v1583 = vpack.c.b16 %v1556, %v1553
        %v1584 = vpack.c.b16 %v1557, %v1554
        %v1585 = vpack.c.b16 %v1561, %v1558
        %v1586 = vpack.c.b16 %v1562, %v1559
        %v1587 = vpack.c.b16 %v1563, %v1560
        %1612 = vmatprep.subr.bf16.mxu0 %v1565
        %1613 = vmatpush1.bf16.msra.mxu0 %v1564
        %1614 = vmatprep.subr.bf16.mxu0 %v1568
        %1615 = vmatpush1.bf16.msra.mxu0 %v1567
        %1616 = vmatprep.subr.bf16.mxu0 %v1571
        %1617 = vmatpush1.bf16.msra.mxu0 %v1570
        %1618 = vmatprep.subr.bf16.mxu0 %v1574
        %1619 = vmatpush1.bf16.msra.mxu0 %v1573
        %1620 = vmatprep.subr.bf16.mxu0 %v1577
        %1621 = vmatpush1.bf16.msra.mxu0 %v1576
        %1622 = vmatprep.subr.bf16.mxu0 %v1580
        %1623 = vmatpush1.bf16.msra.mxu0 %v1579
        %1624 = vmatprep.subr.bf16.mxu0 %v1583
        %1625 = vmatpush1.bf16.msra.mxu0 %v1582
        %1626 = vmatprep.subr.bf16.mxu0 %v1586
        %1627 = vmatpush1.bf16.msra.mxu0 %v1585
        %1628 = vmatprep.subr.bf16.mxu0 0
        %1629 = vmatpush1.bf16.msra.mxu0 0
        %1630 = vmatprep.subr.bf16.mxu0 0
        %1631 = vmatpush1.bf16.msra.mxu0 0
        %1632 = vmatprep.subr.bf16.mxu0 0
        %1633 = vmatpush1.bf16.msra.mxu0 0
        %1634 = vmatprep.subr.bf16.mxu0 0
        %1635 = vmatpush1.bf16.msra.mxu0 0
        %1636 = vmatprep.subr.bf16.mxu0 0
        %1637 = vmatpush1.bf16.msra.mxu0 0
        %1638 = vmatprep.subr.bf16.mxu0 0
        %1639 = vmatpush1.bf16.msra.mxu0 0
        %1640 = vmatprep.subr.bf16.mxu0 0
        %1641 = vmatpush1.bf16.msra.mxu0 0
        %1642 = vmatprep.subr.bf16.mxu0 0
        %1643 = vmatpush1.bf16.msra.mxu0 0
        %1644 = vmatprep.mubr.bf16.mxu0 0
        %1645 = vmatmul.mubr.bf16.gmra.mrb[0].mxu0 %v1482
        %v1646 = vpop.f32.mrb[0].mxu0
        %v1647 = vadd.f32 0.0, %v1646
        %v1648 = vpop.f32.mrb[0].mxu0
        %v1649 = vadd.f32 0.0, %v1648
        %v1650 = vpop.f32.mrb[0].mxu0
        %v1651 = vpop.f32.mrb[0].mxu0
        %1652 = vdwg.mxu0
        %1653 = vmatprep.subr.bf16.mxu0 0
        %1654 = vmatpush1.bf16.msra.mxu0 %v1566
        %1655 = vmatprep.subr.bf16.mxu0 0
        %1656 = vmatpush1.bf16.msra.mxu0 %v1569
        %1657 = vmatprep.subr.bf16.mxu0 0
        %1658 = vmatpush1.bf16.msra.mxu0 %v1572
        %1659 = vmatprep.subr.bf16.mxu0 0
        %1660 = vmatpush1.bf16.msra.mxu0 %v1575
        %1661 = vmatprep.subr.bf16.mxu0 0
        %1662 = vmatpush1.bf16.msra.mxu0 %v1578
        %1663 = vmatprep.subr.bf16.mxu0 0
        %1664 = vmatpush1.bf16.msra.mxu0 %v1581
        %1665 = vmatprep.subr.bf16.mxu0 0
        %1666 = vmatpush1.bf16.msra.mxu0 %v1584
        %1667 = vmatprep.subr.bf16.mxu0 0
        %1668 = vmatpush1.bf16.msra.mxu0 %v1587
        %1669 = vmatprep.subr.bf16.mxu0 0
        %1670 = vmatpush1.bf16.msra.mxu0 0
        %1671 = vmatprep.subr.bf16.mxu0 0
        %1672 = vmatpush1.bf16.msra.mxu0 0
        %1673 = vmatprep.subr.bf16.mxu0 0
        %1674 = vmatpush1.bf16.msra.mxu0 0
        %1675 = vmatprep.subr.bf16.mxu0 0
        %1676 = vmatpush1.bf16.msra.mxu0 0
        %1677 = vmatprep.subr.bf16.mxu0 0
        %1678 = vmatpush1.bf16.msra.mxu0 0
        %1679 = vmatprep.subr.bf16.mxu0 0
        %1680 = vmatpush1.bf16.msra.mxu0 0
        %1681 = vmatprep.subr.bf16.mxu0 0
        %1682 = vmatpush1.bf16.msra.mxu0 0
        %1683 = vmatprep.subr.bf16.mxu0 0
        %1684 = vmatpush1.bf16.msra.mxu0 0
        %1685 = vmatprep.mubr.bf16.mxu0 0
        %1686 = vmatmul.mubr.bf16.gmra.mrb[0].mxu0 %v1482
        %v1687 = vpop.f32.mrb[0].mxu0
        %v1688 = vadd.f32 0.0, %v1687
        %v1689 = vpop.f32.mrb[0].mxu0
        %v1690 = vpop.f32.mrb[0].mxu0
        %v1691 = vpop.f32.mrb[0].mxu0
        %1692 = vdwg.mxu0
        %v1693 = vld [vmem:[#allocation15] sm:$0xff]
        %v1694 = vld [vmem:[#allocation15 + $0x8] sm:$0xf]
        %v1695 = vld [vmem:[#allocation15 + $0xc] sm:$0xff]
        %v1696 = vld [vmem:[#allocation15 + $0x14] sm:$0xf]
        %v1697 = vld [vmem:[#allocation15 + $0x18] sm:$0xff]
        %v1698 = vld [vmem:[#allocation15 + $0x20] sm:$0xf]
        %v1699 = vld [vmem:[#allocation15 + $0x24] sm:$0xff]
        %v1700 = vld [vmem:[#allocation15 + $0x2c] sm:$0xf]
        %v1701 = vld [vmem:[#allocation15 + $0x30] sm:$0xff]
        %v1702 = vld [vmem:[#allocation15 + $0x38] sm:$0xf]
        %v1703 = vld [vmem:[#allocation15 + $0x3c] sm:$0xff]
        %v1704 = vld [vmem:[#allocation15 + $0x44] sm:$0xf]
        %v1705 = vld [vmem:[#allocation15 + $0x48] sm:$0xff]
        %v1706 = vld [vmem:[#allocation15 + $0x50] sm:$0xf]
        %v1707 = vld [vmem:[#allocation15 + $0x54] sm:$0xff]
        %v1708 = vld [vmem:[#allocation15 + $0x5c] sm:$0xf]
        %v1709 = vld [vmem:[#allocation15 + $0x60] sm:$0xff]
        %v1710 = vld [vmem:[#allocation15 + $0x68] sm:$0xf]
        %v1711 = vld [vmem:[#allocation15 + $0x6c] sm:$0xff]
        %v1712 = vld [vmem:[#allocation15 + $0x74] sm:$0xf]
        %v1713 = vld [vmem:[#allocation15 + $0x78] sm:$0xff]
        %v1714 = vld [vmem:[#allocation15 + $0x80] sm:$0xf]
        %v1715 = vld [vmem:[#allocation15 + $0x84] sm:$0xff]
        %v1716 = vld [vmem:[#allocation15 + $0x8c] sm:$0xf]
        %v1717 = vld [vmem:[#allocation15 + $0x90] sm:$0xff]
        %v1718 = vld [vmem:[#allocation15 + $0x98] sm:$0xf]
        %v1719 = vld [vmem:[#allocation15 + $0x9c] sm:$0xff]
        %v1720 = vld [vmem:[#allocation15 + $0xa4] sm:$0xf]
        %v1721 = vld [vmem:[#allocation15 + $0xa8] sm:$0xff]
        %v1722 = vld [vmem:[#allocation15 + $0xb0] sm:$0xf]
        %v1723 = vld [vmem:[#allocation15 + $0xb4] sm:$0xff]
        %v1724 = vld [vmem:[#allocation15 + $0xbc] sm:$0xf]
        %v1757 = vunpack.c.l.b16 %v1693
        %v1758 = vunpack.c.h.b16 %v1693
        %v1759 = vunpack.c.l.b16 %v1694
        %v1760 = vunpack.c.l.b16 %v1695
        %v1761 = vunpack.c.h.b16 %v1695
        %v1762 = vunpack.c.l.b16 %v1696
        %v1763 = vunpack.c.l.b16 %v1697
        %v1764 = vunpack.c.h.b16 %v1697
        %v1765 = vunpack.c.l.b16 %v1698
        %v1766 = vunpack.c.l.b16 %v1699
        %v1767 = vunpack.c.h.b16 %v1699
        %v1768 = vunpack.c.l.b16 %v1700
        %v1769 = vunpack.c.l.b16 %v1701
        %v1770 = vunpack.c.h.b16 %v1701
        %v1771 = vunpack.c.l.b16 %v1702
        %v1772 = vunpack.c.l.b16 %v1703
        %v1773 = vunpack.c.h.b16 %v1703
        %v1774 = vunpack.c.l.b16 %v1704
        %v1775 = vunpack.c.l.b16 %v1705
        %v1776 = vunpack.c.h.b16 %v1705
        %v1777 = vunpack.c.l.b16 %v1706
        %v1778 = vunpack.c.l.b16 %v1707
        %v1779 = vunpack.c.h.b16 %v1707
        %v1780 = vunpack.c.l.b16 %v1708
        %v1781 = vunpack.c.l.b16 %v1709
        %v1782 = vunpack.c.h.b16 %v1709
        %v1783 = vunpack.c.l.b16 %v1710
        %v1784 = vunpack.c.l.b16 %v1711
        %v1785 = vunpack.c.h.b16 %v1711
        %v1786 = vunpack.c.l.b16 %v1712
        %v1787 = vunpack.c.l.b16 %v1713
        %v1788 = vunpack.c.h.b16 %v1713
        %v1789 = vunpack.c.l.b16 %v1714
        %v1790 = vunpack.c.l.b16 %v1715
        %v1791 = vunpack.c.h.b16 %v1715
        %v1792 = vunpack.c.l.b16 %v1716
        %v1793 = vunpack.c.l.b16 %v1717
        %v1794 = vunpack.c.h.b16 %v1717
        %v1795 = vunpack.c.l.b16 %v1718
        %v1796 = vunpack.c.l.b16 %v1719
        %v1797 = vunpack.c.h.b16 %v1719
        %v1798 = vunpack.c.l.b16 %v1720
        %v1799 = vunpack.c.l.b16 %v1721
        %v1800 = vunpack.c.h.b16 %v1721
        %v1801 = vunpack.c.l.b16 %v1722
        %v1802 = vunpack.c.l.b16 %v1723
        %v1803 = vunpack.c.h.b16 %v1723
        %v1804 = vunpack.c.l.b16 %v1724
        %v1805 = vpack.c.b16 %v1760, %v1757
        %v1806 = vpack.c.b16 %v1761, %v1758
        %v1807 = vpack.c.b16 %v1762, %v1759
        %v1808 = vpack.c.b16 %v1766, %v1763
        %v1809 = vpack.c.b16 %v1767, %v1764
        %v1810 = vpack.c.b16 %v1768, %v1765
        %v1811 = vpack.c.b16 %v1772, %v1769
        %v1812 = vpack.c.b16 %v1773, %v1770
        %v1813 = vpack.c.b16 %v1774, %v1771
        %v1814 = vpack.c.b16 %v1778, %v1775
        %v1815 = vpack.c.b16 %v1779, %v1776
        %v1816 = vpack.c.b16 %v1780, %v1777
        %v1817 = vpack.c.b16 %v1784, %v1781
        %v1818 = vpack.c.b16 %v1785, %v1782
        %v1819 = vpack.c.b16 %v1786, %v1783
        %v1820 = vpack.c.b16 %v1790, %v1787
        %v1821 = vpack.c.b16 %v1791, %v1788
        %v1822 = vpack.c.b16 %v1792, %v1789
        %v1823 = vpack.c.b16 %v1796, %v1793
        %v1824 = vpack.c.b16 %v1797, %v1794
        %v1825 = vpack.c.b16 %v1798, %v1795
        %v1826 = vpack.c.b16 %v1802, %v1799
        %v1827 = vpack.c.b16 %v1803, %v1800
        %v1828 = vpack.c.b16 %v1804, %v1801
        %1853 = vmatprep.subr.bf16.mxu0 %v1806
        %1854 = vmatpush1.bf16.msra.mxu0 %v1805
        %1855 = vmatprep.subr.bf16.mxu0 %v1809
        %1856 = vmatpush1.bf16.msra.mxu0 %v1808
        %1857 = vmatprep.subr.bf16.mxu0 %v1812
        %1858 = vmatpush1.bf16.msra.mxu0 %v1811
        %1859 = vmatprep.subr.bf16.mxu0 %v1815
        %1860 = vmatpush1.bf16.msra.mxu0 %v1814
        %1861 = vmatprep.subr.bf16.mxu0 %v1818
        %1862 = vmatpush1.bf16.msra.mxu0 %v1817
        %1863 = vmatprep.subr.bf16.mxu0 %v1821
        %1864 = vmatpush1.bf16.msra.mxu0 %v1820
        %1865 = vmatprep.subr.bf16.mxu0 %v1824
        %1866 = vmatpush1.bf16.msra.mxu0 %v1823
        %1867 = vmatprep.subr.bf16.mxu0 %v1827
        %1868 = vmatpush1.bf16.msra.mxu0 %v1826
        %1869 = vmatprep.subr.bf16.mxu0 0
        %1870 = vmatpush1.bf16.msra.mxu0 0
        %1871 = vmatprep.subr.bf16.mxu0 0
        %1872 = vmatpush1.bf16.msra.mxu0 0
        %1873 = vmatprep.subr.bf16.mxu0 0
        %1874 = vmatpush1.bf16.msra.mxu0 0
        %1875 = vmatprep.subr.bf16.mxu0 0
        %1876 = vmatpush1.bf16.msra.mxu0 0
        %1877 = vmatprep.subr.bf16.mxu0 0
        %1878 = vmatpush1.bf16.msra.mxu0 0
        %1879 = vmatprep.subr.bf16.mxu0 0
        %1880 = vmatpush1.bf16.msra.mxu0 0
        %1881 = vmatprep.subr.bf16.mxu0 0
        %1882 = vmatpush1.bf16.msra.mxu0 0
        %1883 = vmatprep.subr.bf16.mxu0 0
        %1884 = vmatpush1.bf16.msra.mxu0 0
        %1885 = vmatprep.mubr.bf16.mxu0 0
        %1886 = vmatmul.mubr.bf16.gmra.mrb[0].mxu0 %v644
        %v1887 = vpop.f32.mrb[0].mxu0
        %v1888 = vadd.f32 0.0, %v1887
        %v1889 = vpop.f32.mrb[0].mxu0
        %v1890 = vadd.f32 0.0, %v1889
        %v1891 = vpop.f32.mrb[0].mxu0
        %v1892 = vpop.f32.mrb[0].mxu0
        %1893 = vdwg.mxu0
        %1894 = vmatprep.subr.bf16.mxu0 0
        %1895 = vmatpush1.bf16.msra.mxu0 %v1807
        %1896 = vmatprep.subr.bf16.mxu0 0
        %1897 = vmatpush1.bf16.msra.mxu0 %v1810
        %1898 = vmatprep.subr.bf16.mxu0 0
        %1899 = vmatpush1.bf16.msra.mxu0 %v1813
        %1900 = vmatprep.subr.bf16.mxu0 0
        %1901 = vmatpush1.bf16.msra.mxu0 %v1816
        %1902 = vmatprep.subr.bf16.mxu0 0
        %1903 = vmatpush1.bf16.msra.mxu0 %v1819
        %1904 = vmatprep.subr.bf16.mxu0 0
        %1905 = vmatpush1.bf16.msra.mxu0 %v1822
        %1906 = vmatprep.subr.bf16.mxu0 0
        %1907 = vmatpush1.bf16.msra.mxu0 %v1825
        %1908 = vmatprep.subr.bf16.mxu0 0
        %1909 = vmatpush1.bf16.msra.mxu0 %v1828
        %1910 = vmatprep.subr.bf16.mxu0 0
        %1911 = vmatpush1.bf16.msra.mxu0 0
        %1912 = vmatprep.subr.bf16.mxu0 0
        %1913 = vmatpush1.bf16.msra.mxu0 0
        %1914 = vmatprep.subr.bf16.mxu0 0
        %1915 = vmatpush1.bf16.msra.mxu0 0
        %1916 = vmatprep.subr.bf16.mxu0 0
        %1917 = vmatpush1.bf16.msra.mxu0 0
        %1918 = vmatprep.subr.bf16.mxu0 0
        %1919 = vmatpush1.bf16.msra.mxu0 0
        %1920 = vmatprep.subr.bf16.mxu0 0
        %1921 = vmatpush1.bf16.msra.mxu0 0
        %1922 = vmatprep.subr.bf16.mxu0 0
        %1923 = vmatpush1.bf16.msra.mxu0 0
        %1924 = vmatprep.subr.bf16.mxu0 0
        %1925 = vmatpush1.bf16.msra.mxu0 0
        %1926 = vmatprep.mubr.bf16.mxu0 0
        %1927 = vmatmul.mubr.bf16.gmra.mrb[0].mxu0 %v644
        %v1928 = vpop.f32.mrb[0].mxu0
        %v1929 = vadd.f32 0.0, %v1928
        %v1930 = vpop.f32.mrb[0].mxu0
        %v1931 = vpop.f32.mrb[0].mxu0
        %v1932 = vpop.f32.mrb[0].mxu0
        %1933 = vdwg.mxu0
        %v1934 = vadd.f32 %v1409, %v1647
        %v1935 = vadd.f32 %v1410, %v1649
        %v1936 = vadd.f32 %v1411, %v1688
        %v1937 = vadd.f32 %v1934, %v1888
        %v1938 = vxor.u32 %v1937, 2147483648
        %v1939 = vmul.f32 %v1938, 1.442695
        %v1940 = vpow.pop %v1939
        %v1941 = vadd.f32 %v1940, 1.0
        %v1942 = vrcp.pop %v1941
        %v1943 = vmul.f32 1.0, %v1942
        %v1944 = vadd.f32 %v1935, %v1890
        %v1945 = vxor.u32 %v1944, 2147483648
        %v1946 = vmul.f32 %v1945, 1.442695
        %v1947 = vpow.pop %v1946
        %v1948 = vadd.f32 %v1947, 1.0
        %v1949 = vrcp.pop %v1948
        %v1950 = vmul.f32 1.0, %v1949
        %v1951 = vld [vmem:[%s9] sm:$0x1]
        %v1953 = vlaneseq
        %v1954 = vshrl.u32 %v1953, 7
        %v1955 = vsub.s32 0, %v1954
        %v1956 = vrot.slane %v1951, %v1955
        %v1958 = vadd.f32 %v1929, %v1956
        %v1959 = vmul.f32 %v1943, %v1958
        %v1960 = vadd.f32 %v1936, %v1959
        %v1961 = vtanh.pop %v1960
        %v1962 = vsub.f32 1.0, %v1950
        %v1963 = vmul.f32 %v1962, %v1961
        %v1964 = vmul.f32 %v1950, %v643
        %v1965 = vadd.f32 %v1963, %v1964
        %1966 = vst [vmem:[#allocation2] sm:$0xff] %v1965
        %1967 = vst [vmem:[%s460] sm:$0xff] %v1965
        %s1968 = sand.u32 %s253, 1
        %s1969 = scalar_lea.sflag [#allocation6], %s1968
        %s1970 = sand.u32 %s253, 1
        %s1971 = smul.addr %s1970, 8
        %s1972 = scalar_lea.vmem [#allocation16], %s1971
        // Predicated region
        $region93: #{tpu_custom_call.1} parent=59 // pred_check
          %p1973 = pneg %p263
        $region94: #{tpu_custom_call.1} parent=59 // pred_check_branch
          %1975 = sbr.rel (%p1973) target = $region96
        $region95: #{tpu_custom_call.1} parent=59 // pred_region
          %s1977 = ssub.s32 128, 128
          %1978 = vsyncadd %s1969, %s1977
          %s1979 = smul.addr %s30, 128
          %s1980 = scalar_lea.hbm %s10, %s1979
          %s1982 = sshll.u32 %s1972, 4
          %s1983 = int_to_ptr.vmem [resolvable:$true] %s1982
          %1985 = dma.vmem_to_hbm [thread:$0]  %s1983, 128, %s1980, %s1969
        $region96: #{tpu_custom_call.1} parent=59 // pred_fallthru
          _
      $region60: #{tpu_custom_call.1} parent=5 // pred_fallthru
        _
      %p1986 = scmp.le.s32.totalorder 2, %s25
      // Predicated region
      $region97: #{tpu_custom_call.1} parent=5 // pred_check
        %p1987 = pneg %p1986
      $region98: #{tpu_custom_call.1} parent=5 // pred_check_branch
        %1989 = sbr.rel (%p1987) target = $region100
      $region99: #{tpu_custom_call.1} parent=5 // pred_region
        %s1990 = ssub.s32 %s25, 2
        // Predicated region
        $region101: #{tpu_custom_call.1} parent=99 // pred_check
          %p1991 = pneg %p269
        $region102: #{tpu_custom_call.1} parent=99 // pred_check_branch
          %1993 = sbr.rel (%p1991) target = $region104
        $region103: #{tpu_custom_call.1} parent=99 // pred_region
          %s1994 = sand.u32 %s254, 1
          %s1995 = scalar_lea.sflag [#allocation6], %s1994
          %s1996 = sand.u32 %s254, 1
          %s1997 = smul.addr %s1996, 8
          %s1998 = scalar_lea.vmem [#allocation16], %s1997
          %1999 = dma.done %s1995, 128
        $region104: #{tpu_custom_call.1} parent=99 // pred_fallthru
          _
      $region100: #{tpu_custom_call.1} parent=5 // pred_fallthru
        _
    $region6: #{tpu_custom_call.1} parent=1 // loop_footer
      %s29 = sadd.s32 1, %s25
    $region7: #{tpu_custom_call.1} parent=1 // loop_footer_branch
      %24 = sbr.rel target = $region3
    $region8: #{tpu_custom_call.1} parent=1 // loop_exit
      _
    %2000 = vsyncpa [#allocation5], 1
    %s2001 = scalar_lea.sflag [#allocation5], 1
    %2002 = vsyncpa %s2001, 1
    %2003 = vsyncpa [#allocation8], 1
    %2004 = vsyncpa [#allocation11], 1
    %2005 = vsyncpa [#allocation14], 1
    %2006 = vsyncpa [#allocation6], 1
    %s2007 = scalar_lea.sflag [#allocation6], 1
    %2008 = vsyncpa %s2007, 1

</llo_original>
